<compile_context>
chip_gen: v5e
topology: v5e:2x2
jax: 0.10.0
libtpu: 0.0.40
codegen_flags: <defaults>
</compile_context>

<pallas_src>
import functools
import math

import jax
import jax.numpy as jnp
from jax.experimental import pallas as pl
from jax.experimental.pallas import tpu as pltpu


def _layer_norm(x, gamma, beta, eps=1e-5):
    # x: (M, D); gamma/beta: (1, D)
    mean = jnp.mean(x, axis=-1, keepdims=True)
    var = jnp.mean((x - mean) ** 2, axis=-1, keepdims=True)
    inv = jax.lax.rsqrt(var + eps)
    return (x - mean) * inv * gamma + beta


def _elu(x):
    # clamp the exp argument so the unselected branch never overflows
    return jnp.where(x > 0.0, x, jnp.exp(jnp.minimum(x, 0.0)) - 1.0)


def encoder_block_kernel(
    x_ref, mask_ref,
    ln1_g_ref, ln1_b_ref,
    wqkv_ref, wo_ref,
    ln2_g_ref, ln2_b_ref,
    w1_ref, b1_ref, w2_ref, b2_ref,
    out_ref,
    *, num_heads, matmul_dtype, approx_recip, mlp_chunk,
):
    Bb, T, D = x_ref.shape
    M = Bb * T
    d_k = D // num_heads
    scale = 1.0 / math.sqrt(d_k)

    def mm(a, b):
        # f32 accumulation; operands in matmul_dtype (bf16 in production).
        return jnp.dot(a.astype(matmul_dtype), b.astype(matmul_dtype),
                       preferred_element_type=jnp.float32)

    x = x_ref[...].reshape(M, D)                           # fuse batch rows

    # Additive padding bias, built ONCE per grid step (finite, so fully masked
    # rows give a uniform softmax instead of NaN).
    pad = mask_ref[...].astype(jnp.int32)                  # (Bb, 1, T) i8->i32
    bias = jnp.where(pad > 0, -1e30, 0.0)                  # (Bb, 1, T) f32

    # --- LayerNorm1 + fused Q/K/V projection (one (M,D)@(D,3D) matmul) -------
    t = _layer_norm(x, ln1_g_ref[...], ln1_b_ref[...])
    qkv = mm(t, wqkv_ref[...])                             # (M, 3D) f32
    # 1/sqrt(d_k) folded into Q once; cast activations ONCE for the MXU.
    q = (qkv[:, :D] * scale).astype(matmul_dtype)
    k = qkv[:, D:2 * D].astype(matmul_dtype)
    v = qkv[:, 2 * D:].astype(matmul_dtype)

    # --- multi-head attention: per-head ctx -> lane concat -> ONE WO matmul --
    ctx_heads = []
    for h in range(num_heads):
        sl = slice(h * d_k, (h + 1) * d_k)
        qh = q[:, sl].reshape(Bb, T, d_k)
        kh = k[:, sl].reshape(Bb, T, d_k)
        vh = v[:, sl].reshape(Bb, T, d_k)
        s = jnp.einsum('bqd,bkd->bqk', qh, kh,
                       preferred_element_type=jnp.float32) + bias   # (Bb,T,T)
        s = s - jnp.max(s, axis=-1, keepdims=True)
        p = jnp.exp(s)
        denom = jnp.sum(p, axis=-1, keepdims=True)                  # (Bb,T,1)
        ctx = jnp.einsum('bqk,bkd->bqd', p.astype(matmul_dtype), vh,
                         preferred_element_type=jnp.float32)        # (Bb,T,dk)
        # normalize the small (T, d_k) result, not the (T, T) matrix
        ctx = ctx * pl.reciprocal(denom, approx=approx_recip)
        ctx_heads.append(ctx.reshape(M, d_k))
    ctx_full = jnp.concatenate(ctx_heads, axis=-1)          # (M, D)
    attn = mm(ctx_full, wo_ref[...])                        # one full-K WO matmul

    # --- residual 1 + LayerNorm2 + MLP(ELU) + residual 2 ----------------------
    x2 = x + attn
    t2 = _layer_norm(x2, ln2_g_ref[...], ln2_b_ref[...])
    Hdim = w1_ref.shape[1]
    if mlp_chunk is None or mlp_chunk >= Hdim:
        h1 = _elu(mm(t2, w1_ref[...]) + b1_ref[...])
        mlp = mm(h1, w2_ref[...]) + b2_ref[...]
    else:
        # H-chunked MLP: bounds live h1 activation for very large hidden dims.
        t2c = t2.astype(matmul_dtype)                       # hoisted cast
        mlp = jnp.zeros((M, D), jnp.float32) + b2_ref[...]
        for c0 in range(0, Hdim, mlp_chunk):
            c1 = min(c0 + mlp_chunk, Hdim)
            h1c = _elu(jnp.dot(t2c, w1_ref[:, c0:c1].astype(matmul_dtype),
                               preferred_element_type=jnp.float32)
                       + b1_ref[:, c0:c1])
            mlp = mlp + jnp.dot(h1c.astype(matmul_dtype),
                                w2_ref[c0:c1, :].astype(matmul_dtype),
                                preferred_element_type=jnp.float32)
    out_ref[...] = (x2 + mlp).reshape(Bb, T, D)


def _vmem_capacity_bytes():
    cap = 128 * 1024 * 1024
    try:
        info = pltpu.get_tpu_info()
        cap = int(getattr(info, "vmem_capacity_bytes", cap))
    except Exception:
        pass
    return cap


def _choose_batch_block(B, T, vmem_cap):
    # Target fused rows: ~1024 on 128 MiB parts (v5e/v6e), ~512 on v7x (64 MiB).
    target_rows = 1024 if vmem_cap >= 96 * 1024 * 1024 else 512
    bb = max(1, min(B, target_rows // max(T, 1)))
    while B % bb:
        bb -= 1
    # v7x has 2 TensorCores: prefer >= 2 grid steps for the "parallel" axis,
    # but only if each step still has enough fused rows (~128) to feed the MXU.
    if B // bb < 2:
        for cand in range(bb - 1, 0, -1):
            if B % cand == 0 and (B // cand) >= 2 and cand * T >= 128:
                bb = cand
                break
    return bb


def encoder_block_pallas(x, padding_mask, params, num_heads,
                         batch_block=None, matmul_dtype=jnp.bfloat16,
                         approx_recip=None, mlp_hidden_chunk=None):
    """x: (B, T, D) f32; padding_mask: (B, 1, 1, T) bool (True == masked)."""
    B, T, D = x.shape
    H = params["w1"].shape[1]

    if approx_recip is None:
        approx_recip = (matmul_dtype != jnp.float32)

    vmem_cap = _vmem_capacity_bytes()
    # ~51 MiB on v7x (64 MiB/TC), capped at 96 MiB on 128 MiB parts.
    vmem_limit = min((vmem_cap * 4) // 5, 96 * 1024 * 1024)

    if batch_block is None:
        batch_block = _choose_batch_block(B, T, vmem_cap)
    while B % batch_block:
        batch_block -= 1
    Bb = batch_block

    # bf16 weights in production: halves weight DMA + VMEM residency.
    wqkv = jnp.concatenate(
        [params["wq"], params["wk"], params["wv"]], axis=1).astype(matmul_dtype)
    wo = params["wo"].astype(matmul_dtype)
    w1 = params["w1"].astype(matmul_dtype)
    w2 = params["w2"].astype(matmul_dtype)

    # int8 mask as (B, 1, T): block's last two dims equal the full array dims,
    # so layout is clean for any Bb; additive bias is built in-kernel.
    mask_i8 = padding_mask.reshape(B, 1, T).astype(jnp.int8)

    # Constant-index inputs: single-buffered (no re-DMA after step 0 anyway).
    def wspec(shape):
        return pl.BlockSpec(shape, lambda i, _s=shape: (0,) * len(_s),
                            pipeline_mode=pl.Buffered(1))

    kernel = functools.partial(
        encoder_block_kernel, num_heads=num_heads, matmul_dtype=matmul_dtype,
        approx_recip=approx_recip, mlp_chunk=mlp_hidden_chunk)

    return pl.pallas_call(
        kernel,
        out_shape=jax.ShapeDtypeStruct((B, T, D), jnp.float32),
        grid_spec=pltpu.PrefetchScalarGridSpec(
            num_scalar_prefetch=0,
            grid=(B // Bb,),
            in_specs=[
                pl.BlockSpec((Bb, T, D), lambda i: (i, 0, 0)),   # x
                pl.BlockSpec((Bb, 1, T), lambda i: (i, 0, 0)),   # padding mask
                wspec((1, D)),                                   # ln1 gamma
                wspec((1, D)),                                   # ln1 beta
                wspec((D, 3 * D)),                               # WQKV (fused)
                wspec((D, D)),                                   # WO
                wspec((1, D)),                                   # ln2 gamma
                wspec((1, D)),                                   # ln2 beta
                wspec((D, H)),                                   # W1
                wspec((1, H)),                                   # b1
                wspec((H, D)),                                   # W2
                wspec((1, D)),                                   # b2
            ],
            out_specs=pl.BlockSpec((Bb, T, D), lambda i: (i, 0, 0)),
        ),
        compiler_params=pltpu.CompilerParams(
            dimension_semantics=("parallel",),      # shards across TCs on v7x
            vmem_limit_bytes=int(vmem_limit),
        ),
    )(
        x, mask_i8,
        params["ln1_g"], params["ln1_b"],
        wqkv, wo,
        params["ln2_g"], params["ln2_b"],
        w1, params["b1"], w2, params["b2"],
    )


def encoder_block_ref(x, padding_mask, params, num_heads):
    """Pure-JAX reference mirroring the PyTorch forward (eval mode)."""
    B, T, D = x.shape
    d_k = D // num_heads

    def ln(v, g, b, eps=1e-5):
        m = jnp.mean(v, axis=-1, keepdims=True)
        var = jnp.mean((v - m) ** 2, axis=-1, keepdims=True)
        return (v - m) / jnp.sqrt(var + eps) * g + b

    t = ln(x, params["ln1_g"], params["ln1_b"])
    q = (t @ params["wq"]).reshape(B, T, num_heads, d_k).transpose(0, 2, 1, 3)
    k = (t @ params["wk"]).reshape(B, T, num_heads, d_k).transpose(0, 2, 1, 3)
    v = (t @ params["wv"]).reshape(B, T, num_heads, d_k).transpose(0, 2, 1, 3)
    s = jnp.einsum("bhqd,bhkd->bhqk", q, k) / math.sqrt(d_k)
    s = jnp.where(padding_mask, -jnp.inf, s)
    w = jax.nn.softmax(s, axis=-1)
    ctx = jnp.einsum("bhqk,bhkd->bhqd", w, v).transpose(0, 2, 1, 3).reshape(B, T, D)
    x = x + ctx @ params["wo"]

    t2 = ln(x, params["ln2_g"], params["ln2_b"])
    h1 = t2 @ params["w1"] + params["b1"]
    h1 = jnp.where(h1 > 0, h1, jnp.exp(h1) - 1.0)
    x = x + h1 @ params["w2"] + params["b2"]
    return x


if __name__ == "__main__":
    B, T = 2, 8
    d_model, num_heads, hidden_factor = 32, 4, 4
    H = hidden_factor * d_model

    key = jax.random.PRNGKey(0)
    keys = jax.random.split(key, 12)

    def xavier(k, shape):
        fan_in, fan_out = shape[0], shape[1]
        bound = math.sqrt(6.0 / (fan_in + fan_out))
        return jax.random.uniform(k, shape, jnp.float32, -bound, bound)

    params = {
        "ln1_g": jnp.ones((1, d_model), jnp.float32),
        "ln1_b": jnp.zeros((1, d_model), jnp.float32),
        "wq": xavier(keys[0], (d_model, d_model)),
        "wk": xavier(keys[1], (d_model, d_model)),
        "wv": xavier(keys[2], (d_model, d_model)),
        "wo": xavier(keys[3], (d_model, d_model)),
        "ln2_g": jnp.ones((1, d_model), jnp.float32),
        "ln2_b": jnp.zeros((1, d_model), jnp.float32),
        "w1": xavier(keys[4], (d_model, H)),
        "b1": 0.01 * jax.random.normal(keys[5], (1, H), jnp.float32),
        "w2": xavier(keys[6], (H, d_model)),
        "b2": 0.01 * jax.random.normal(keys[7], (1, d_model), jnp.float32),
    }

    x = jax.random.normal(keys[8], (B, T, d_model), jnp.float32)
    # Padding mask: last 2 positions of batch 1 are padded (True == masked).
    pad = jnp.zeros((B, T), bool).at[1, -2:].set(True)
    padding_mask = pad[:, None, None, :]                     # (B, 1, 1, T)

    ref = encoder_block_ref(x, padding_mask, params, num_heads)

    # Exact f32 path: tight tolerance check of the kernel semantics.
    out_f32 = encoder_block_pallas(x, padding_mask, params, num_heads,
                                   matmul_dtype=jnp.float32)
    out_f32 = jax.block_until_ready(out_f32)
    assert out_f32.shape == (B, T, d_model)
    assert jnp.allclose(out_f32, ref, atol=2e-4, rtol=2e-4), "f32 mismatch vs ref"

    # Production path: bf16 MXU operands / bf16 weights, looser tolerance.
    out_bf16 = encoder_block_pallas(x, padding_mask, params, num_heads)
    out_bf16 = jax.block_until_ready(out_bf16)
    assert out_bf16.shape == (B, T, d_model)
    assert jnp.allclose(out_bf16, ref, atol=8e-2, rtol=5e-2), "bf16 mismatch vs ref"

    print("KERNEL_OK")
</pallas_src>

<mosaic_0001>
module attributes {stable_mosaic.version = 11 : i64} {
  func.func @encoder_block_kernel(%arg0: i32, %arg1: memref<2x8x32xf32, #tpu.memory_space<vmem>>, %arg2: memref<2x1x8xi8, #tpu.memory_space<vmem>>, %arg3: memref<1x32xf32, #tpu.memory_space<vmem>>, %arg4: memref<1x32xf32, #tpu.memory_space<vmem>>, %arg5: memref<32x96xf32, #tpu.memory_space<vmem>>, %arg6: memref<32x32xf32, #tpu.memory_space<vmem>>, %arg7: memref<1x32xf32, #tpu.memory_space<vmem>>, %arg8: memref<1x32xf32, #tpu.memory_space<vmem>>, %arg9: memref<32x128xf32, #tpu.memory_space<vmem>>, %arg10: memref<1x128xf32, #tpu.memory_space<vmem>>, %arg11: memref<128x32xf32, #tpu.memory_space<vmem>>, %arg12: memref<1x32xf32, #tpu.memory_space<vmem>>, %arg13: memref<2x8x32xf32, #tpu.memory_space<vmem>>) attributes {dimension_semantics = [#tpu.dimension_semantics<parallel>], iteration_bounds = array<i64: 1>, scalar_prefetch = 0 : i64, scratch_operands = 0 : i64, tpu.core_type = #tpu.core_type<tc>, window_params = [{transform_indices = @transform_0, window_bounds = array<i64: 2, 8, 32>}, {transform_indices = @transform_1, window_bounds = array<i64: 2, 1, 8>}, {pipeline_mode = #tpu.pipeline_mode<synchronous>, transform_indices = @transform_2, window_bounds = array<i64: 1, 32>}, {pipeline_mode = #tpu.pipeline_mode<synchronous>, transform_indices = @transform_3, window_bounds = array<i64: 1, 32>}, {pipeline_mode = #tpu.pipeline_mode<synchronous>, transform_indices = @transform_4, window_bounds = array<i64: 32, 96>}, {pipeline_mode = #tpu.pipeline_mode<synchronous>, transform_indices = @transform_5, window_bounds = array<i64: 32, 32>}, {pipeline_mode = #tpu.pipeline_mode<synchronous>, transform_indices = @transform_6, window_bounds = array<i64: 1, 32>}, {pipeline_mode = #tpu.pipeline_mode<synchronous>, transform_indices = @transform_7, window_bounds = array<i64: 1, 32>}, {pipeline_mode = #tpu.pipeline_mode<synchronous>, transform_indices = @transform_8, window_bounds = array<i64: 32, 128>}, {pipeline_mode = #tpu.pipeline_mode<synchronous>, transform_indices = @transform_9, window_bounds = array<i64: 1, 128>}, {pipeline_mode = #tpu.pipeline_mode<synchronous>, transform_indices = @transform_10, window_bounds = array<i64: 128, 32>}, {pipeline_mode = #tpu.pipeline_mode<synchronous>, transform_indices = @transform_11, window_bounds = array<i64: 1, 32>}, {transform_indices = @transform_12, window_bounds = array<i64: 2, 8, 32>}]} {
    %c0 = arith.constant 0 : index
    %c0_0 = arith.constant 0 : index
    %c0_1 = arith.constant 0 : index
    %0 = vector.load %arg1[%c0, %c0_0, %c0_1] : memref<2x8x32xf32, #tpu.memory_space<vmem>>, vector<2x8x32xf32>
    %1 = vector.shape_cast %0 : vector<2x8x32xf32> to vector<16x32xf32>
    %c0_2 = arith.constant 0 : index
    %c0_3 = arith.constant 0 : index
    %c0_4 = arith.constant 0 : index
    %2 = vector.load %arg2[%c0_2, %c0_3, %c0_4] : memref<2x1x8xi8, #tpu.memory_space<vmem>>, vector<2x1x8xi8>
    %3 = arith.extsi %2 : vector<2x1x8xi8> to vector<2x1x8xi32>
    %c0_i32 = arith.constant 0 : i32
    %4 = vector.broadcast %c0_i32 : i32 to vector<2x1x8xi32>
    %5 = arith.cmpi sgt, %3, %4 : vector<2x1x8xi32>
    %cst = arith.constant -1.000000e+30 : f32
    %cst_5 = arith.constant 0.000000e+00 : f32
    %6 = vector.broadcast %cst : f32 to vector<2x1x8xf32>
    %7 = vector.broadcast %cst_5 : f32 to vector<2x1x8xf32>
    %8 = arith.select %5, %6, %7 : vector<2x1x8xi1>, vector<2x1x8xf32>
    %c0_6 = arith.constant 0 : index
    %c0_7 = arith.constant 0 : index
    %9 = vector.load %arg3[%c0_6, %c0_7] : memref<1x32xf32, #tpu.memory_space<vmem>>, vector<1x32xf32>
    %c0_8 = arith.constant 0 : index
    %c0_9 = arith.constant 0 : index
    %10 = vector.load %arg4[%c0_8, %c0_9] : memref<1x32xf32, #tpu.memory_space<vmem>>, vector<1x32xf32>
    %cst_10 = arith.constant dense<0.000000e+00> : vector<16xf32>
    %11 = vector.multi_reduction <add>, %1, %cst_10 [1] : vector<16x32xf32> to vector<16xf32>
    %12 = vector.shape_cast %11 : vector<16xf32> to vector<16x1xf32>
    %cst_11 = arith.constant 3.200000e+01 : f32
    %13 = vector.broadcast %cst_11 : f32 to vector<16x1xf32>
    %14 = arith.divf %12, %13 : vector<16x1xf32>
    %15 = vector.broadcast %14 : vector<16x1xf32> to vector<16x32xf32>
    %16 = arith.subf %1, %15 : vector<16x32xf32>
    %17 = arith.mulf %16, %16 : vector<16x32xf32>
    %cst_12 = arith.constant dense<0.000000e+00> : vector<16xf32>
    %18 = vector.multi_reduction <add>, %17, %cst_12 [1] : vector<16x32xf32> to vector<16xf32>
    %19 = vector.shape_cast %18 : vector<16xf32> to vector<16x1xf32>
    %cst_13 = arith.constant 3.200000e+01 : f32
    %20 = vector.broadcast %cst_13 : f32 to vector<16x1xf32>
    %21 = arith.divf %19, %20 : vector<16x1xf32>
    %cst_14 = arith.constant 9.99999974E-6 : f32
    %22 = vector.broadcast %cst_14 : f32 to vector<16x1xf32>
    %23 = arith.addf %21, %22 : vector<16x1xf32>
    %24 = math.rsqrt %23 : vector<16x1xf32>
    %25 = vector.broadcast %14 : vector<16x1xf32> to vector<16x32xf32>
    %26 = arith.subf %1, %25 : vector<16x32xf32>
    %27 = vector.broadcast %24 : vector<16x1xf32> to vector<16x32xf32>
    %28 = arith.mulf %26, %27 : vector<16x32xf32>
    %29 = vector.broadcast %9 : vector<1x32xf32> to vector<16x32xf32>
    %30 = arith.mulf %28, %29 : vector<16x32xf32>
    %31 = vector.broadcast %10 : vector<1x32xf32> to vector<16x32xf32>
    %32 = arith.addf %30, %31 : vector<16x32xf32>
    %c0_15 = arith.constant 0 : index
    %c0_16 = arith.constant 0 : index
    %33 = vector.load %arg5[%c0_15, %c0_16] : memref<32x96xf32, #tpu.memory_space<vmem>>, vector<32x96xf32>
    %cst_17 = arith.constant dense<0.000000e+00> : vector<16x96xf32>
    %34 = tpu.matmul %32, %33, %cst_17 {dimension_numbers = #tpu.dot_dimension_numbers<[1], [0], [0], [1], [0, 0, 1, 1], [], []>} : vector<16x32xf32>, vector<32x96xf32>, vector<16x96xf32> -> vector<16x96xf32>
    %35 = vector.extract_strided_slice %34 {offsets = [0, 0], sizes = [16, 32], strides = [1, 1]} : vector<16x96xf32> to vector<16x32xf32>
    %cst_18 = arith.constant 0.353553385 : f32
    %36 = vector.broadcast %cst_18 : f32 to vector<16x32xf32>
    %37 = arith.mulf %35, %36 : vector<16x32xf32>
    %38 = vector.extract_strided_slice %34 {offsets = [0, 32], sizes = [16, 32], strides = [1, 1]} : vector<16x96xf32> to vector<16x32xf32>
    %39 = vector.extract_strided_slice %34 {offsets = [0, 64], sizes = [16, 32], strides = [1, 1]} : vector<16x96xf32> to vector<16x32xf32>
    %40 = vector.extract_strided_slice %37 {offsets = [0, 0], sizes = [16, 8], strides = [1, 1]} : vector<16x32xf32> to vector<16x8xf32>
    %41 = vector.shape_cast %40 : vector<16x8xf32> to vector<2x8x8xf32>
    %42 = vector.extract_strided_slice %38 {offsets = [0, 0], sizes = [16, 8], strides = [1, 1]} : vector<16x32xf32> to vector<16x8xf32>
    %43 = vector.shape_cast %42 : vector<16x8xf32> to vector<2x8x8xf32>
    %44 = vector.extract_strided_slice %39 {offsets = [0, 0], sizes = [16, 8], strides = [1, 1]} : vector<16x32xf32> to vector<16x8xf32>
    %45 = vector.shape_cast %44 : vector<16x8xf32> to vector<2x8x8xf32>
    "tpu.trace_start"() <{level = 10 : i32, message = "bqd,bkd->bqk"}> : () -> ()
    %cst_19 = arith.constant dense<0.000000e+00> : vector<2x8x8xf32>
    %46 = tpu.matmul %41, %43, %cst_19 {dimension_numbers = #tpu.dot_dimension_numbers<[2], [2], [1], [1], [0, 0, 0, 1, 1, 1], [0], [0]>} : vector<2x8x8xf32>, vector<2x8x8xf32>, vector<2x8x8xf32> -> vector<2x8x8xf32>
    "tpu.trace_stop"() : () -> ()
    %47 = vector.broadcast %8 : vector<2x1x8xf32> to vector<2x8x8xf32>
    %48 = arith.addf %46, %47 : vector<2x8x8xf32>
    %cst_20 = arith.constant dense<0xFF800000> : vector<2x8xf32>
    %49 = vector.multi_reduction <maximumf>, %48, %cst_20 [2] : vector<2x8x8xf32> to vector<2x8xf32>
    %50 = vector.shape_cast %49 : vector<2x8xf32> to vector<2x8x1xf32>
    %51 = vector.broadcast %50 : vector<2x8x1xf32> to vector<2x8x8xf32>
    %52 = arith.subf %48, %51 : vector<2x8x8xf32>
    %53 = math.exp %52 : vector<2x8x8xf32>
    %cst_21 = arith.constant dense<0.000000e+00> : vector<2x8xf32>
    %54 = vector.multi_reduction <add>, %53, %cst_21 [2] : vector<2x8x8xf32> to vector<2x8xf32>
    %55 = vector.shape_cast %54 : vector<2x8xf32> to vector<2x8x1xf32>
    "tpu.trace_start"() <{level = 10 : i32, message = "bqk,bkd->bqd"}> : () -> ()
    %cst_22 = arith.constant dense<0.000000e+00> : vector<2x8x8xf32>
    %56 = tpu.matmul %53, %45, %cst_22 {dimension_numbers = #tpu.dot_dimension_numbers<[2], [1], [1], [2], [0, 0, 0, 1, 1, 2], [0], [0]>} : vector<2x8x8xf32>, vector<2x8x8xf32>, vector<2x8x8xf32> -> vector<2x8x8xf32>
    "tpu.trace_stop"() : () -> ()
    %57 = tpu.reciprocal %55 : vector<2x8x1xf32> -> vector<2x8x1xf32>
    %58 = vector.broadcast %57 : vector<2x8x1xf32> to vector<2x8x8xf32>
    %59 = arith.mulf %56, %58 : vector<2x8x8xf32>
    %60 = vector.shape_cast %59 : vector<2x8x8xf32> to vector<16x8xf32>
    %61 = vector.extract_strided_slice %37 {offsets = [0, 8], sizes = [16, 8], strides = [1, 1]} : vector<16x32xf32> to vector<16x8xf32>
    %62 = vector.shape_cast %61 : vector<16x8xf32> to vector<2x8x8xf32>
    %63 = vector.extract_strided_slice %38 {offsets = [0, 8], sizes = [16, 8], strides = [1, 1]} : vector<16x32xf32> to vector<16x8xf32>
    %64 = vector.shape_cast %63 : vector<16x8xf32> to vector<2x8x8xf32>
    %65 = vector.extract_strided_slice %39 {offsets = [0, 8], sizes = [16, 8], strides = [1, 1]} : vector<16x32xf32> to vector<16x8xf32>
    %66 = vector.shape_cast %65 : vector<16x8xf32> to vector<2x8x8xf32>
    "tpu.trace_start"() <{level = 10 : i32, message = "bqd,bkd->bqk"}> : () -> ()
    %cst_23 = arith.constant dense<0.000000e+00> : vector<2x8x8xf32>
    %67 = tpu.matmul %62, %64, %cst_23 {dimension_numbers = #tpu.dot_dimension_numbers<[2], [2], [1], [1], [0, 0, 0, 1, 1, 1], [0], [0]>} : vector<2x8x8xf32>, vector<2x8x8xf32>, vector<2x8x8xf32> -> vector<2x8x8xf32>
    "tpu.trace_stop"() : () -> ()
    %68 = vector.broadcast %8 : vector<2x1x8xf32> to vector<2x8x8xf32>
    %69 = arith.addf %67, %68 : vector<2x8x8xf32>
    %cst_24 = arith.constant dense<0xFF800000> : vector<2x8xf32>
    %70 = vector.multi_reduction <maximumf>, %69, %cst_24 [2] : vector<2x8x8xf32> to vector<2x8xf32>
    %71 = vector.shape_cast %70 : vector<2x8xf32> to vector<2x8x1xf32>
    %72 = vector.broadcast %71 : vector<2x8x1xf32> to vector<2x8x8xf32>
    %73 = arith.subf %69, %72 : vector<2x8x8xf32>
    %74 = math.exp %73 : vector<2x8x8xf32>
    %cst_25 = arith.constant dense<0.000000e+00> : vector<2x8xf32>
    %75 = vector.multi_reduction <add>, %74, %cst_25 [2] : vector<2x8x8xf32> to vector<2x8xf32>
    %76 = vector.shape_cast %75 : vector<2x8xf32> to vector<2x8x1xf32>
    "tpu.trace_start"() <{level = 10 : i32, message = "bqk,bkd->bqd"}> : () -> ()
    %cst_26 = arith.constant dense<0.000000e+00> : vector<2x8x8xf32>
    %77 = tpu.matmul %74, %66, %cst_26 {dimension_numbers = #tpu.dot_dimension_numbers<[2], [1], [1], [2], [0, 0, 0, 1, 1, 2], [0], [0]>} : vector<2x8x8xf32>, vector<2x8x8xf32>, vector<2x8x8xf32> -> vector<2x8x8xf32>
    "tpu.trace_stop"() : () -> ()
    %78 = tpu.reciprocal %76 : vector<2x8x1xf32> -> vector<2x8x1xf32>
    %79 = vector.broadcast %78 : vector<2x8x1xf32> to vector<2x8x8xf32>
    %80 = arith.mulf %77, %79 : vector<2x8x8xf32>
    %81 = vector.shape_cast %80 : vector<2x8x8xf32> to vector<16x8xf32>
    %82 = vector.extract_strided_slice %37 {offsets = [0, 16], sizes = [16, 8], strides = [1, 1]} : vector<16x32xf32> to vector<16x8xf32>
    %83 = vector.shape_cast %82 : vector<16x8xf32> to vector<2x8x8xf32>
    %84 = vector.extract_strided_slice %38 {offsets = [0, 16], sizes = [16, 8], strides = [1, 1]} : vector<16x32xf32> to vector<16x8xf32>
    %85 = vector.shape_cast %84 : vector<16x8xf32> to vector<2x8x8xf32>
    %86 = vector.extract_strided_slice %39 {offsets = [0, 16], sizes = [16, 8], strides = [1, 1]} : vector<16x32xf32> to vector<16x8xf32>
    %87 = vector.shape_cast %86 : vector<16x8xf32> to vector<2x8x8xf32>
    "tpu.trace_start"() <{level = 10 : i32, message = "bqd,bkd->bqk"}> : () -> ()
    %cst_27 = arith.constant dense<0.000000e+00> : vector<2x8x8xf32>
    %88 = tpu.matmul %83, %85, %cst_27 {dimension_numbers = #tpu.dot_dimension_numbers<[2], [2], [1], [1], [0, 0, 0, 1, 1, 1], [0], [0]>} : vector<2x8x8xf32>, vector<2x8x8xf32>, vector<2x8x8xf32> -> vector<2x8x8xf32>
    "tpu.trace_stop"() : () -> ()
    %89 = vector.broadcast %8 : vector<2x1x8xf32> to vector<2x8x8xf32>
    %90 = arith.addf %88, %89 : vector<2x8x8xf32>
    %cst_28 = arith.constant dense<0xFF800000> : vector<2x8xf32>
    %91 = vector.multi_reduction <maximumf>, %90, %cst_28 [2] : vector<2x8x8xf32> to vector<2x8xf32>
    %92 = vector.shape_cast %91 : vector<2x8xf32> to vector<2x8x1xf32>
    %93 = vector.broadcast %92 : vector<2x8x1xf32> to vector<2x8x8xf32>
    %94 = arith.subf %90, %93 : vector<2x8x8xf32>
    %95 = math.exp %94 : vector<2x8x8xf32>
    %cst_29 = arith.constant dense<0.000000e+00> : vector<2x8xf32>
    %96 = vector.multi_reduction <add>, %95, %cst_29 [2] : vector<2x8x8xf32> to vector<2x8xf32>
    %97 = vector.shape_cast %96 : vector<2x8xf32> to vector<2x8x1xf32>
    "tpu.trace_start"() <{level = 10 : i32, message = "bqk,bkd->bqd"}> : () -> ()
    %cst_30 = arith.constant dense<0.000000e+00> : vector<2x8x8xf32>
    %98 = tpu.matmul %95, %87, %cst_30 {dimension_numbers = #tpu.dot_dimension_numbers<[2], [1], [1], [2], [0, 0, 0, 1, 1, 2], [0], [0]>} : vector<2x8x8xf32>, vector<2x8x8xf32>, vector<2x8x8xf32> -> vector<2x8x8xf32>
    "tpu.trace_stop"() : () -> ()
    %99 = tpu.reciprocal %97 : vector<2x8x1xf32> -> vector<2x8x1xf32>
    %100 = vector.broadcast %99 : vector<2x8x1xf32> to vector<2x8x8xf32>
    %101 = arith.mulf %98, %100 : vector<2x8x8xf32>
    %102 = vector.shape_cast %101 : vector<2x8x8xf32> to vector<16x8xf32>
    %103 = vector.extract_strided_slice %37 {offsets = [0, 24], sizes = [16, 8], strides = [1, 1]} : vector<16x32xf32> to vector<16x8xf32>
    %104 = vector.shape_cast %103 : vector<16x8xf32> to vector<2x8x8xf32>
    %105 = vector.extract_strided_slice %38 {offsets = [0, 24], sizes = [16, 8], strides = [1, 1]} : vector<16x32xf32> to vector<16x8xf32>
    %106 = vector.shape_cast %105 : vector<16x8xf32> to vector<2x8x8xf32>
    %107 = vector.extract_strided_slice %39 {offsets = [0, 24], sizes = [16, 8], strides = [1, 1]} : vector<16x32xf32> to vector<16x8xf32>
    %108 = vector.shape_cast %107 : vector<16x8xf32> to vector<2x8x8xf32>
    "tpu.trace_start"() <{level = 10 : i32, message = "bqd,bkd->bqk"}> : () -> ()
    %cst_31 = arith.constant dense<0.000000e+00> : vector<2x8x8xf32>
    %109 = tpu.matmul %104, %106, %cst_31 {dimension_numbers = #tpu.dot_dimension_numbers<[2], [2], [1], [1], [0, 0, 0, 1, 1, 1], [0], [0]>} : vector<2x8x8xf32>, vector<2x8x8xf32>, vector<2x8x8xf32> -> vector<2x8x8xf32>
    "tpu.trace_stop"() : () -> ()
    %110 = vector.broadcast %8 : vector<2x1x8xf32> to vector<2x8x8xf32>
    %111 = arith.addf %109, %110 : vector<2x8x8xf32>
    %cst_32 = arith.constant dense<0xFF800000> : vector<2x8xf32>
    %112 = vector.multi_reduction <maximumf>, %111, %cst_32 [2] : vector<2x8x8xf32> to vector<2x8xf32>
    %113 = vector.shape_cast %112 : vector<2x8xf32> to vector<2x8x1xf32>
    %114 = vector.broadcast %113 : vector<2x8x1xf32> to vector<2x8x8xf32>
    %115 = arith.subf %111, %114 : vector<2x8x8xf32>
    %116 = math.exp %115 : vector<2x8x8xf32>
    %cst_33 = arith.constant dense<0.000000e+00> : vector<2x8xf32>
    %117 = vector.multi_reduction <add>, %116, %cst_33 [2] : vector<2x8x8xf32> to vector<2x8xf32>
    %118 = vector.shape_cast %117 : vector<2x8xf32> to vector<2x8x1xf32>
    "tpu.trace_start"() <{level = 10 : i32, message = "bqk,bkd->bqd"}> : () -> ()
    %cst_34 = arith.constant dense<0.000000e+00> : vector<2x8x8xf32>
    %119 = tpu.matmul %116, %108, %cst_34 {dimension_numbers = #tpu.dot_dimension_numbers<[2], [1], [1], [2], [0, 0, 0, 1, 1, 2], [0], [0]>} : vector<2x8x8xf32>, vector<2x8x8xf32>, vector<2x8x8xf32> -> vector<2x8x8xf32>
    "tpu.trace_stop"() : () -> ()
    %120 = tpu.reciprocal %118 : vector<2x8x1xf32> -> vector<2x8x1xf32>
    %121 = vector.broadcast %120 : vector<2x8x1xf32> to vector<2x8x8xf32>
    %122 = arith.mulf %119, %121 : vector<2x8x8xf32>
    %123 = vector.shape_cast %122 : vector<2x8x8xf32> to vector<16x8xf32>
    %124 = tpu.concatenate %60, %81, %102, %123 in 1 : vector<16x8xf32>, vector<16x8xf32>, vector<16x8xf32>, vector<16x8xf32> -> vector<16x32xf32>
    %c0_35 = arith.constant 0 : index
    %c0_36 = arith.constant 0 : index
    %125 = vector.load %arg6[%c0_35, %c0_36] : memref<32x32xf32, #tpu.memory_space<vmem>>, vector<32x32xf32>
    %cst_37 = arith.constant dense<0.000000e+00> : vector<16x32xf32>
    %126 = tpu.matmul %124, %125, %cst_37 {dimension_numbers = #tpu.dot_dimension_numbers<[1], [0], [0], [1], [0, 0, 1, 1], [], []>} : vector<16x32xf32>, vector<32x32xf32>, vector<16x32xf32> -> vector<16x32xf32>
    %127 = arith.addf %1, %126 : vector<16x32xf32>
    %c0_38 = arith.constant 0 : index
    %c0_39 = arith.constant 0 : index
    %128 = vector.load %arg7[%c0_38, %c0_39] : memref<1x32xf32, #tpu.memory_space<vmem>>, vector<1x32xf32>
    %c0_40 = arith.constant 0 : index
    %c0_41 = arith.constant 0 : index
    %129 = vector.load %arg8[%c0_40, %c0_41] : memref<1x32xf32, #tpu.memory_space<vmem>>, vector<1x32xf32>
    %cst_42 = arith.constant dense<0.000000e+00> : vector<16xf32>
    %130 = vector.multi_reduction <add>, %127, %cst_42 [1] : vector<16x32xf32> to vector<16xf32>
    %131 = vector.shape_cast %130 : vector<16xf32> to vector<16x1xf32>
    %cst_43 = arith.constant 3.200000e+01 : f32
    %132 = vector.broadcast %cst_43 : f32 to vector<16x1xf32>
    %133 = arith.divf %131, %132 : vector<16x1xf32>
    %134 = vector.broadcast %133 : vector<16x1xf32> to vector<16x32xf32>
    %135 = arith.subf %127, %134 : vector<16x32xf32>
    %136 = arith.mulf %135, %135 : vector<16x32xf32>
    %cst_44 = arith.constant dense<0.000000e+00> : vector<16xf32>
    %137 = vector.multi_reduction <add>, %136, %cst_44 [1] : vector<16x32xf32> to vector<16xf32>
    %138 = vector.shape_cast %137 : vector<16xf32> to vector<16x1xf32>
    %cst_45 = arith.constant 3.200000e+01 : f32
    %139 = vector.broadcast %cst_45 : f32 to vector<16x1xf32>
    %140 = arith.divf %138, %139 : vector<16x1xf32>
    %cst_46 = arith.constant 9.99999974E-6 : f32
    %141 = vector.broadcast %cst_46 : f32 to vector<16x1xf32>
    %142 = arith.addf %140, %141 : vector<16x1xf32>
    %143 = math.rsqrt %142 : vector<16x1xf32>
    %144 = vector.broadcast %133 : vector<16x1xf32> to vector<16x32xf32>
    %145 = arith.subf %127, %144 : vector<16x32xf32>
    %146 = vector.broadcast %143 : vector<16x1xf32> to vector<16x32xf32>
    %147 = arith.mulf %145, %146 : vector<16x32xf32>
    %148 = vector.broadcast %128 : vector<1x32xf32> to vector<16x32xf32>
    %149 = arith.mulf %147, %148 : vector<16x32xf32>
    %150 = vector.broadcast %129 : vector<1x32xf32> to vector<16x32xf32>
    %151 = arith.addf %149, %150 : vector<16x32xf32>
    %c0_47 = arith.constant 0 : index
    %c0_48 = arith.constant 0 : index
    %152 = vector.load %arg9[%c0_47, %c0_48] : memref<32x128xf32, #tpu.memory_space<vmem>>, vector<32x128xf32>
    %cst_49 = arith.constant dense<0.000000e+00> : vector<16x128xf32>
    %153 = tpu.matmul %151, %152, %cst_49 {dimension_numbers = #tpu.dot_dimension_numbers<[1], [0], [0], [1], [0, 0, 1, 1], [], []>} : vector<16x32xf32>, vector<32x128xf32>, vector<16x128xf32> -> vector<16x128xf32>
    %c0_50 = arith.constant 0 : index
    %c0_51 = arith.constant 0 : index
    %154 = vector.load %arg10[%c0_50, %c0_51] : memref<1x128xf32, #tpu.memory_space<vmem>>, vector<1x128xf32>
    %155 = vector.broadcast %154 : vector<1x128xf32> to vector<16x128xf32>
    %156 = arith.addf %153, %155 : vector<16x128xf32>
    %cst_52 = arith.constant 0.000000e+00 : f32
    %157 = vector.broadcast %cst_52 : f32 to vector<16x128xf32>
    %158 = arith.cmpf ogt, %156, %157 : vector<16x128xf32>
    %cst_53 = arith.constant 0.000000e+00 : f32
    %159 = vector.broadcast %cst_53 : f32 to vector<16x128xf32>
    %160 = arith.minimumf %156, %159 : vector<16x128xf32>
    %161 = math.exp %160 : vector<16x128xf32>
    %cst_54 = arith.constant 1.000000e+00 : f32
    %162 = vector.broadcast %cst_54 : f32 to vector<16x128xf32>
    %163 = arith.subf %161, %162 : vector<16x128xf32>
    %164 = arith.select %158, %156, %163 : vector<16x128xi1>, vector<16x128xf32>
    %c0_55 = arith.constant 0 : index
    %c0_56 = arith.constant 0 : index
    %165 = vector.load %arg11[%c0_55, %c0_56] : memref<128x32xf32, #tpu.memory_space<vmem>>, vector<128x32xf32>
    %cst_57 = arith.constant dense<0.000000e+00> : vector<16x32xf32>
    %166 = tpu.matmul %164, %165, %cst_57 {dimension_numbers = #tpu.dot_dimension_numbers<[1], [0], [0], [1], [0, 0, 1, 1], [], []>} : vector<16x128xf32>, vector<128x32xf32>, vector<16x32xf32> -> vector<16x32xf32>
    %c0_58 = arith.constant 0 : index
    %c0_59 = arith.constant 0 : index
    %167 = vector.load %arg12[%c0_58, %c0_59] : memref<1x32xf32, #tpu.memory_space<vmem>>, vector<1x32xf32>
    %168 = vector.broadcast %167 : vector<1x32xf32> to vector<16x32xf32>
    %169 = arith.addf %166, %168 : vector<16x32xf32>
    %170 = arith.addf %127, %169 : vector<16x32xf32>
    %171 = vector.shape_cast %170 : vector<16x32xf32> to vector<2x8x32xf32>
    %c0_60 = arith.constant 0 : index
    %c0_61 = arith.constant 0 : index
    %c0_62 = arith.constant 0 : index
    %172 = vector.load %arg13[%c0_60, %c0_61, %c0_62] : memref<2x8x32xf32, #tpu.memory_space<vmem>>, vector<2x8x32xf32>
    tpu.vector_store %arg13[%c0_60, %c0_61, %c0_62], %171 {strides = array<i32>} : memref<2x8x32xf32, #tpu.memory_space<vmem>>, vector<2x8x32xf32>,
    return
  }
  func.func @transform_0(%arg0: i32) -> (i32, i32, i32) {
    %c0_i32 = arith.constant 0 : i32
    %c0_i32_0 = arith.constant 0 : i32
    %c0_i32_1 = arith.constant 0 : i32
    return %arg0, %c0_i32, %c0_i32_0 : i32, i32, i32
  }
  func.func @transform_1(%arg0: i32) -> (i32, i32, i32) {
    %c0_i32 = arith.constant 0 : i32
    %c0_i32_0 = arith.constant 0 : i32
    %c0_i32_1 = arith.constant 0 : i32
    return %arg0, %c0_i32, %c0_i32_0 : i32, i32, i32
  }
  func.func @transform_2(%arg0: i32) -> (i32, i32) {
    %c0_i32 = arith.constant 0 : i32
    %c0_i32_0 = arith.constant 0 : i32
    %c0_i32_1 = arith.constant 0 : i32
    return %c0_i32, %c0_i32_0 : i32, i32
  }
  func.func @transform_3(%arg0: i32) -> (i32, i32) {
    %c0_i32 = arith.constant 0 : i32
    %c0_i32_0 = arith.constant 0 : i32
    %c0_i32_1 = arith.constant 0 : i32
    return %c0_i32, %c0_i32_0 : i32, i32
  }
  func.func @transform_4(%arg0: i32) -> (i32, i32) {
    %c0_i32 = arith.constant 0 : i32
    %c0_i32_0 = arith.constant 0 : i32
    %c0_i32_1 = arith.constant 0 : i32
    return %c0_i32, %c0_i32_0 : i32, i32
  }
  func.func @transform_5(%arg0: i32) -> (i32, i32) {
    %c0_i32 = arith.constant 0 : i32
    %c0_i32_0 = arith.constant 0 : i32
    %c0_i32_1 = arith.constant 0 : i32
    return %c0_i32, %c0_i32_0 : i32, i32
  }
  func.func @transform_6(%arg0: i32) -> (i32, i32) {
    %c0_i32 = arith.constant 0 : i32
    %c0_i32_0 = arith.constant 0 : i32
    %c0_i32_1 = arith.constant 0 : i32
    return %c0_i32, %c0_i32_0 : i32, i32
  }
  func.func @transform_7(%arg0: i32) -> (i32, i32) {
    %c0_i32 = arith.constant 0 : i32
    %c0_i32_0 = arith.constant 0 : i32
    %c0_i32_1 = arith.constant 0 : i32
    return %c0_i32, %c0_i32_0 : i32, i32
  }
  func.func @transform_8(%arg0: i32) -> (i32, i32) {
    %c0_i32 = arith.constant 0 : i32
    %c0_i32_0 = arith.constant 0 : i32
    %c0_i32_1 = arith.constant 0 : i32
    return %c0_i32, %c0_i32_0 : i32, i32
  }
  func.func @transform_9(%arg0: i32) -> (i32, i32) {
    %c0_i32 = arith.constant 0 : i32
    %c0_i32_0 = arith.constant 0 : i32
    %c0_i32_1 = arith.constant 0 : i32
    return %c0_i32, %c0_i32_0 : i32, i32
  }
  func.func @transform_10(%arg0: i32) -> (i32, i32) {
    %c0_i32 = arith.constant 0 : i32
    %c0_i32_0 = arith.constant 0 : i32
    %c0_i32_1 = arith.constant 0 : i32
    return %c0_i32, %c0_i32_0 : i32, i32
  }
  func.func @transform_11(%arg0: i32) -> (i32, i32) {
    %c0_i32 = arith.constant 0 : i32
    %c0_i32_0 = arith.constant 0 : i32
    %c0_i32_1 = arith.constant 0 : i32
    return %c0_i32, %c0_i32_0 : i32, i32
  }
  func.func @transform_12(%arg0: i32) -> (i32, i32, i32) {
    %c0_i32 = arith.constant 0 : i32
    %c0_i32_0 = arith.constant 0 : i32
    %c0_i32_1 = arith.constant 0 : i32
    return %arg0, %c0_i32, %c0_i32_0 : i32, i32, i32
  }
}

</mosaic_0001>

<llo_original>
// kernel: tpu_custom_call.1
$region0: #{tpu_custom_call.1}
  #allocation0 [shape = 'u32[]', space=smem, size = 0x4, offset = 0x4, fixed_abs, tag = 'smem constant byte address 0x4 - core index']
  #allocation1 [shape = 'u32[72,128]{1,0:T(1,128)}', space=vmem, size = 0x9000, scoped, tag = 'internal scratch']
  %s0 = inlined_call_operand.vmem [shape: f32[2,8,32], index: 0, kind: input, shape index: {}]
  %s1 = inlined_call_operand.vmem [shape: s8[2,1,8], index: 1, kind: input, shape index: {}]
  %s2 = inlined_call_operand.vmem [shape: f32[1,32], index: 2, kind: input, shape index: {}]
  %s3 = inlined_call_operand.vmem [shape: f32[1,32], index: 3, kind: input, shape index: {}]
  %s4 = inlined_call_operand.vmem [shape: f32[32,96], index: 4, kind: input, shape index: {}]
  %s5 = inlined_call_operand.vmem [shape: f32[32,32], index: 5, kind: input, shape index: {}]
  %s6 = inlined_call_operand.vmem [shape: f32[1,32], index: 6, kind: input, shape index: {}]
  %s7 = inlined_call_operand.vmem [shape: f32[1,32], index: 7, kind: input, shape index: {}]
  %s8 = inlined_call_operand.vmem [shape: f32[32,128], index: 8, kind: input, shape index: {}]
  %s9 = inlined_call_operand.vmem [shape: f32[1,128], index: 9, kind: input, shape index: {}]
  %s10 = inlined_call_operand.vmem [shape: f32[128,32], index: 10, kind: input, shape index: {}]
  %s11 = inlined_call_operand.vmem [shape: f32[1,32], index: 11, kind: input, shape index: {}]
  %s12 = inlined_call_operand.hbm [shape: f32[2,8,32], index: 12, kind: output, shape index: {}]
  %s13 = sld [smem:[#allocation0]]
  $region58: #{tpu_custom_call.1} parent=0
    _
  %s15 = ssub.s32 1, %s13
  %s16 = scalar_select 0, %s15, %s13
  $region1: #{tpu_custom_call.1} parent=0
    #allocation2 [shape = 'u8[8192]{0}', space=vmem, size = 0x2000, scoped, tag = 'output window, operand 0, single buffered']
    #allocation3 [shape = 's32[1]{0}', space=sflag, size = 0x4, scoped, tag = 'scoped memory for tpu_custom_call.1']
    %17 = vsyncpa [#allocation3], 0
    // Predicated region
    $region2: #{tpu_custom_call.1} parent=1 // pred_check
      _
    $region3: #{tpu_custom_call.1} parent=1 // pred_check_branch
      %19 = sbr.rel (0) target = $region5
    $region4: #{tpu_custom_call.1} parent=1 // pred_region
      _
    $region5: #{tpu_custom_call.1} parent=1 // pred_fallthru
      _
    // Predicated region
    $region6: #{tpu_custom_call.1} parent=1 // pred_check
      _
    $region7: #{tpu_custom_call.1} parent=1 // pred_check_branch
      %21 = sbr.rel (0) target = $region9
    $region8: #{tpu_custom_call.1} parent=1 // pred_region
      _
    $region9: #{tpu_custom_call.1} parent=1 // pred_fallthru
      _
    // Predicated region
    $region10: #{tpu_custom_call.1} parent=1 // pred_check
      _
    $region11: #{tpu_custom_call.1} parent=1 // pred_check_branch
      %23 = sbr.rel (0) target = $region13
    $region12: #{tpu_custom_call.1} parent=1 // pred_region
      _
    $region13: #{tpu_custom_call.1} parent=1 // pred_fallthru
      _
    // Predicated region
    $region14: #{tpu_custom_call.1} parent=1 // pred_check
      _
    $region15: #{tpu_custom_call.1} parent=1 // pred_check_branch
      %25 = sbr.rel (0) target = $region17
    $region16: #{tpu_custom_call.1} parent=1 // pred_region
      _
    $region17: #{tpu_custom_call.1} parent=1 // pred_fallthru
      _
    // Predicated region
    $region18: #{tpu_custom_call.1} parent=1 // pred_check
      _
    $region19: #{tpu_custom_call.1} parent=1 // pred_check_branch
      %27 = sbr.rel (0) target = $region21
    $region20: #{tpu_custom_call.1} parent=1 // pred_region
      _
    $region21: #{tpu_custom_call.1} parent=1 // pred_fallthru
      _
    // Predicated region
    $region22: #{tpu_custom_call.1} parent=1 // pred_check
      _
    $region23: #{tpu_custom_call.1} parent=1 // pred_check_branch
      %29 = sbr.rel (0) target = $region25
    $region24: #{tpu_custom_call.1} parent=1 // pred_region
      _
    $region25: #{tpu_custom_call.1} parent=1 // pred_fallthru
      _
    // Predicated region
    $region26: #{tpu_custom_call.1} parent=1 // pred_check
      _
    $region27: #{tpu_custom_call.1} parent=1 // pred_check_branch
      %31 = sbr.rel (0) target = $region29
    $region28: #{tpu_custom_call.1} parent=1 // pred_region
      _
    $region29: #{tpu_custom_call.1} parent=1 // pred_fallthru
      _
    // Predicated region
    $region30: #{tpu_custom_call.1} parent=1 // pred_check
      _
    $region31: #{tpu_custom_call.1} parent=1 // pred_check_branch
      %33 = sbr.rel (0) target = $region33
    $region32: #{tpu_custom_call.1} parent=1 // pred_region
      _
    $region33: #{tpu_custom_call.1} parent=1 // pred_fallthru
      _
    // Predicated region
    $region34: #{tpu_custom_call.1} parent=1 // pred_check
      _
    $region35: #{tpu_custom_call.1} parent=1 // pred_check_branch
      %35 = sbr.rel (0) target = $region37
    $region36: #{tpu_custom_call.1} parent=1 // pred_region
      _
    $region37: #{tpu_custom_call.1} parent=1 // pred_fallthru
      _
    // Predicated region
    $region38: #{tpu_custom_call.1} parent=1 // pred_check
      _
    $region39: #{tpu_custom_call.1} parent=1 // pred_check_branch
      %37 = sbr.rel (0) target = $region41
    $region40: #{tpu_custom_call.1} parent=1 // pred_region
      _
    $region41: #{tpu_custom_call.1} parent=1 // pred_fallthru
      _
    // Predicated region
    $region42: #{tpu_custom_call.1} parent=1 // pred_check
      _
    $region43: #{tpu_custom_call.1} parent=1 // pred_check_branch
      %39 = sbr.rel (0) target = $region45
    $region44: #{tpu_custom_call.1} parent=1 // pred_region
      _
    $region45: #{tpu_custom_call.1} parent=1 // pred_fallthru
      _
    // Predicated region
    $region46: #{tpu_custom_call.1} parent=1 // pred_check
      _
    $region47: #{tpu_custom_call.1} parent=1 // pred_check_branch
      %41 = sbr.rel (0) target = $region49
    $region48: #{tpu_custom_call.1} parent=1 // pred_region
      _
    $region49: #{tpu_custom_call.1} parent=1 // pred_fallthru
      _
    %v42 = vld [vmem:[%s0] sm:$0xff]
    %v43 = vld [vmem:[%s0 + $0x8] sm:$0xff]
    %v44 = vld [vmem:[%s1] sm:$0x1]
    %v45 = vld [vmem:[%s1 + $0x1] sm:$0x1]
    %v46 = vunpack.c.0.s8 %v44
    %v47 = vunpack.c.0.s8 %v45
    %vm48 = vcmp.gt.s32.totalorder %v46, 0
    %vm49 = vcmp.gt.s32.totalorder %v47, 0
    %v50 = vsel %vm48, -1e+30, 0.0
    %v51 = vsel %vm49, -1e+30, 0.0
    %v52 = vld [vmem:[%s2] sm:$0x1]
    %v53 = vld [vmem:[%s3] sm:$0x1]
    %vm54 = vcmask 261120
    %v55 = vsel %vm54, %v42, 0.0
    %56 = vadd.xlane.f32.xlu0 %v55
    %v57 = vpop.xlane.xlu0 %56
    %v58 = vsel %vm54, %v43, 0.0
    %59 = vadd.xlane.f32.xlu0 %v58
    %v60 = vpop.xlane.xlu0 %59
    %v61 = vrcp.pop 32.0
    %v62 = vmul.f32 32.0, %v61
    %v63 = vsub.f32 1.0, %v62
    %v64 = vmul.f32 %v61, %v63
    %v65 = vadd.f32 %v61, %v64
    %vm66 = vweird.f32 %v61
    %v67 = vsel %vm66, %v61, %v65
    %v68 = vmul.f32 %v57, %v67
    %v69 = vmul.f32 %v60, %v67
    %v70 = vsub.f32 %v42, %v68
    %v71 = vsub.f32 %v43, %v69
    %v72 = vmul.f32 %v70, %v70
    %v73 = vmul.f32 %v71, %v71
    %v74 = vsel %vm54, %v72, 0.0
    %75 = vadd.xlane.f32.xlu0 %v74
    %v76 = vpop.xlane.xlu0 %75
    %v77 = vsel %vm54, %v73, 0.0
    %78 = vadd.xlane.f32.xlu0 %v77
    %v79 = vpop.xlane.xlu0 %78
    %v80 = vmul.f32 %v76, %v67
    %v81 = vmul.f32 %v79, %v67
    %v82 = vadd.f32 %v80, 1e-05
    %v83 = vadd.f32 %v81, 1e-05
    %v84 = vrsqrt.pop %v82
    %v85 = vmul.f32 %v84, %v82
    %v86 = vmul.f32 %v85, %v84
    %v87 = vmul.f32 0.5, %v86
    %v88 = vsub.f32 1.5, %v87
    %v89 = vmul.f32 %v84, %v88
    %vm90 = vweird.f32 %v82
    %vm91 = vweird.f32 %v84
    %vm92 = vmor %vm90, %vm91
    %v93 = vsel %vm92, %v84, %v89
    %v94 = vrsqrt.pop %v83
    %v95 = vmul.f32 %v94, %v83
    %v96 = vmul.f32 %v95, %v94
    %v97 = vmul.f32 0.5, %v96
    %v98 = vsub.f32 1.5, %v97
    %v99 = vmul.f32 %v94, %v98
    %vm100 = vweird.f32 %v83
    %vm101 = vweird.f32 %v94
    %vm102 = vmor %vm100, %vm101
    %v103 = vsel %vm102, %v94, %v99
    %v104 = vmul.f32 %v70, %v93
    %v105 = vmul.f32 %v71, %v103
    %v107 = vperm.slane %v52, 0
    %v109 = vmul.f32 %v104, %v107
    %v110 = vmul.f32 %v105, %v107
    %v112 = vperm.slane %v53, 0
    %v114 = vadd.f32 %v109, %v112
    %v115 = vadd.f32 %v110, %v112
    %v116 = vld [vmem:[%s4] sm:$0xff]
    %v117 = vld [vmem:[%s4 + $0x8] sm:$0xff]
    %v118 = vld [vmem:[%s4 + $0x10] sm:$0xff]
    %v119 = vld [vmem:[%s4 + $0x18] sm:$0xff]
    %v121 = vsel %vm54, %v114, 0
    %v124 = vsel %vm54, %v115, 0
    %126 = vmatpush.msra.mxu0 0.0
    %127 = vmatpush.msra.mxu0 0.0
    %128 = vmatpush.msra.mxu0 0.0
    %129 = vmatpush.msra.mxu0 0.0
    %130 = vmatpush.msra.mxu0 0.0
    %131 = vmatpush.msra.mxu0 0.0
    %132 = vmatpush.msra.mxu0 0.0
    %133 = vmatpush.msra.mxu0 0.0
    %134 = vmatpush.msra.mxu0 0.0
    %135 = vmatpush.msra.mxu0 0.0
    %136 = vmatpush.msra.mxu0 0.0
    %137 = vmatpush.msra.mxu0 0.0
    %138 = vmatpush.msra.mxu0 %v119
    %139 = vmatpush.msra.mxu0 %v118
    %140 = vmatpush.msra.mxu0 %v117
    %141 = vmatpush.msra.mxu0 %v116
    %142 = vmatmul.f32.gmra.mxu0 %v121
    %v143 = vpop.f32.mrf.mxu0
    %v144 = vadd.f32 0.0, %v143
    %145 = vmatmul.f32.gmra.mxu0 %v124
    %v146 = vpop.f32.mrf.mxu0
    %v147 = vadd.f32 0.0, %v146
    %148 = vdwg.mxu0
    %v149 = vmul.f32 %v144, 0.35355338
    %v150 = vmul.f32 %v147, 0.35355338
    %v151 = vperm.slane %v50, 0
    %v152 = vperm.slane %v51, 0
    %154 = vrot.lane.b32.xlu0 %v144, 96
    %v155 = vpop.permute.xlu0 %154
    %vm156 = vcmask 64512
    %v158 = vsel %vm156, %v149, 0
    %v160 = vsel %vm156, %v155, 0
    %162 = vmatpush.xpose.msra.mxu0 0.0
    %163 = vmatpush.xpose.msra.mxu0 0.0
    %164 = vmatpush.xpose.msra.mxu0 0.0
    %165 = vmatpush.xpose.msra.mxu0 0.0
    %166 = vmatpush.xpose.msra.mxu0 0.0
    %167 = vmatpush.xpose.msra.mxu0 0.0
    %168 = vmatpush.xpose.msra.mxu0 0.0
    %169 = vmatpush.xpose.msra.mxu0 0.0
    %170 = vmatpush.xpose.msra.mxu0 0.0
    %171 = vmatpush.xpose.msra.mxu0 0.0
    %172 = vmatpush.xpose.msra.mxu0 0.0
    %173 = vmatpush.xpose.msra.mxu0 0.0
    %174 = vmatpush.xpose.msra.mxu0 0.0
    %175 = vmatpush.xpose.msra.mxu0 0.0
    %176 = vmatpush.xpose.msra.mxu0 0.0
    %177 = vmatpush.xpose.msra.mxu0 %v160
    %178 = vmatmul.f32.gmra.mxu0 %v158
    %v179 = vpop.f32.mrf.mxu0
    %v180 = vadd.f32 %v151, %v179
    %181 = vdwg.mxu0
    %183 = vrot.lane.b32.xlu0 %v147, 96
    %v184 = vpop.permute.xlu0 %183
    %v186 = vsel %vm156, %v150, 0
    %v188 = vsel %vm156, %v184, 0
    %190 = vmatpush.xpose.msra.mxu0 0.0
    %191 = vmatpush.xpose.msra.mxu0 0.0
    %192 = vmatpush.xpose.msra.mxu0 0.0
    %193 = vmatpush.xpose.msra.mxu0 0.0
    %194 = vmatpush.xpose.msra.mxu0 0.0
    %195 = vmatpush.xpose.msra.mxu0 0.0
    %196 = vmatpush.xpose.msra.mxu0 0.0
    %197 = vmatpush.xpose.msra.mxu0 0.0
    %198 = vmatpush.xpose.msra.mxu0 0.0
    %199 = vmatpush.xpose.msra.mxu0 0.0
    %200 = vmatpush.xpose.msra.mxu0 0.0
    %201 = vmatpush.xpose.msra.mxu0 0.0
    %202 = vmatpush.xpose.msra.mxu0 0.0
    %203 = vmatpush.xpose.msra.mxu0 0.0
    %204 = vmatpush.xpose.msra.mxu0 0.0
    %205 = vmatpush.xpose.msra.mxu0 %v188
    %206 = vmatmul.f32.gmra.mxu0 %v186
    %v207 = vpop.f32.mrf.mxu0
    %v208 = vadd.f32 %v152, %v207
    %209 = vdwg.mxu0
    %v210 = vsel %vm156, %v180, -inf
    %211 = vmax.xlane.f32.xlu0 %v210
    %v212 = vpop.xlane.xlu0 %211
    %v213 = vsel %vm156, %v208, -inf
    %214 = vmax.xlane.f32.xlu0 %v213
    %v215 = vpop.xlane.xlu0 %214
    %v216 = vsub.f32 %v180, %v212
    %v217 = vsub.f32 %v208, %v215
    %v218 = vmul.f32 %v216, 1.442695
    %v219 = vpow.pop %v218
    %v220 = vmul.f32 %v217, 1.442695
    %v221 = vpow.pop %v220
    %v222 = vsel %vm156, %v219, 0.0
    %223 = vadd.xlane.f32.xlu0 %v222
    %v224 = vpop.xlane.xlu0 %223
    %v225 = vsel %vm156, %v221, 0.0
    %226 = vadd.xlane.f32.xlu0 %v225
    %v227 = vpop.xlane.xlu0 %226
    %228 = vrot.lane.b32.xlu0 %v144, 64
    %v229 = vpop.permute.xlu0 %228
    %v232 = vsel %vm156, %v219, 0
    %234 = vmatpush.msra.mxu0 0.0
    %235 = vmatpush.msra.mxu0 0.0
    %236 = vmatpush.msra.mxu0 0.0
    %237 = vmatpush.msra.mxu0 0.0
    %238 = vmatpush.msra.mxu0 0.0
    %239 = vmatpush.msra.mxu0 0.0
    %240 = vmatpush.msra.mxu0 0.0
    %241 = vmatpush.msra.mxu0 0.0
    %242 = vmatpush.msra.mxu0 0.0
    %243 = vmatpush.msra.mxu0 0.0
    %244 = vmatpush.msra.mxu0 0.0
    %245 = vmatpush.msra.mxu0 0.0
    %246 = vmatpush.msra.mxu0 0.0
    %247 = vmatpush.msra.mxu0 0.0
    %248 = vmatpush.msra.mxu0 0.0
    %249 = vmatpush.msra.mxu0 %v229
    %250 = vmatmul.f32.gmra.mxu0 %v232
    %v251 = vpop.f32.mrf.mxu0
    %v252 = vadd.f32 0.0, %v251
    %253 = vdwg.mxu0
    %254 = vrot.lane.b32.xlu0 %v147, 64
    %v255 = vpop.permute.xlu0 %254
    %v258 = vsel %vm156, %v221, 0
    %260 = vmatpush.msra.mxu0 0.0
    %261 = vmatpush.msra.mxu0 0.0
    %262 = vmatpush.msra.mxu0 0.0
    %263 = vmatpush.msra.mxu0 0.0
    %264 = vmatpush.msra.mxu0 0.0
    %265 = vmatpush.msra.mxu0 0.0
    %266 = vmatpush.msra.mxu0 0.0
    %267 = vmatpush.msra.mxu0 0.0
    %268 = vmatpush.msra.mxu0 0.0
    %269 = vmatpush.msra.mxu0 0.0
    %270 = vmatpush.msra.mxu0 0.0
    %271 = vmatpush.msra.mxu0 0.0
    %272 = vmatpush.msra.mxu0 0.0
    %273 = vmatpush.msra.mxu0 0.0
    %274 = vmatpush.msra.mxu0 0.0
    %275 = vmatpush.msra.mxu0 %v255
    %276 = vmatmul.f32.gmra.mxu0 %v258
    %v277 = vpop.f32.mrf.mxu0
    %v278 = vadd.f32 0.0, %v277
    %279 = vdwg.mxu0
    %v280 = vrcp.pop %v224
    %v281 = vmul.f32 %v224, %v280
    %v282 = vsub.f32 1.0, %v281
    %v283 = vmul.f32 %v280, %v282
    %v284 = vadd.f32 %v280, %v283
    %vm285 = vweird.f32 %v224
    %vm286 = vweird.f32 %v280
    %vm287 = vmor %vm285, %vm286
    %v288 = vsel %vm287, %v280, %v284
    %v289 = vand.u32 2147483647, %v224
    %vm290 = vcmp.eq.f32.partialorder %v289, 8.507059e+37
    %v291 = vand.u32 %v224, 2147483648
    %v292 = vor.u32 1.1754944e-38, %v291
    %v293 = vsel %vm290, %v292, %v288
    %v294 = vrcp.pop %v227
    %v295 = vmul.f32 %v227, %v294
    %v296 = vsub.f32 1.0, %v295
    %v297 = vmul.f32 %v294, %v296
    %v298 = vadd.f32 %v294, %v297
    %vm299 = vweird.f32 %v227
    %vm300 = vweird.f32 %v294
    %vm301 = vmor %vm299, %vm300
    %v302 = vsel %vm301, %v294, %v298
    %v303 = vand.u32 2147483647, %v227
    %vm304 = vcmp.eq.f32.partialorder %v303, 8.507059e+37
    %v305 = vand.u32 %v227, 2147483648
    %v306 = vor.u32 1.1754944e-38, %v305
    %v307 = vsel %vm304, %v306, %v302
    %v308 = vmul.f32 %v252, %v293
    %v309 = vmul.f32 %v278, %v307
    %310 = vrot.lane.b32.xlu0 %v149, 120
    %v311 = vpop.permute.xlu0 %310
    %312 = vrot.lane.b32.xlu0 %v144, 88
    %v313 = vpop.permute.xlu0 %312
    %v314 = vsel %vm156, %v311, 0
    %v316 = vsel %vm156, %v313, 0
    %318 = vmatpush.xpose.msra.mxu0 0.0
    %319 = vmatpush.xpose.msra.mxu0 0.0
    %320 = vmatpush.xpose.msra.mxu0 0.0
    %321 = vmatpush.xpose.msra.mxu0 0.0
    %322 = vmatpush.xpose.msra.mxu0 0.0
    %323 = vmatpush.xpose.msra.mxu0 0.0
    %324 = vmatpush.xpose.msra.mxu0 0.0
    %325 = vmatpush.xpose.msra.mxu0 0.0
    %326 = vmatpush.xpose.msra.mxu0 0.0
    %327 = vmatpush.xpose.msra.mxu0 0.0
    %328 = vmatpush.xpose.msra.mxu0 0.0
    %329 = vmatpush.xpose.msra.mxu0 0.0
    %330 = vmatpush.xpose.msra.mxu0 0.0
    %331 = vmatpush.xpose.msra.mxu0 0.0
    %332 = vmatpush.xpose.msra.mxu0 0.0
    %333 = vmatpush.xpose.msra.mxu0 %v316
    %334 = vmatmul.f32.gmra.mxu0 %v314
    %v335 = vpop.f32.mrf.mxu0
    %v336 = vadd.f32 %v151, %v335
    %337 = vdwg.mxu0
    %338 = vrot.lane.b32.xlu0 %v150, 120
    %v339 = vpop.permute.xlu0 %338
    %340 = vrot.lane.b32.xlu0 %v147, 88
    %v341 = vpop.permute.xlu0 %340
    %v342 = vsel %vm156, %v339, 0
    %v344 = vsel %vm156, %v341, 0
    %346 = vmatpush.xpose.msra.mxu0 0.0
    %347 = vmatpush.xpose.msra.mxu0 0.0
    %348 = vmatpush.xpose.msra.mxu0 0.0
    %349 = vmatpush.xpose.msra.mxu0 0.0
    %350 = vmatpush.xpose.msra.mxu0 0.0
    %351 = vmatpush.xpose.msra.mxu0 0.0
    %352 = vmatpush.xpose.msra.mxu0 0.0
    %353 = vmatpush.xpose.msra.mxu0 0.0
    %354 = vmatpush.xpose.msra.mxu0 0.0
    %355 = vmatpush.xpose.msra.mxu0 0.0
    %356 = vmatpush.xpose.msra.mxu0 0.0
    %357 = vmatpush.xpose.msra.mxu0 0.0
    %358 = vmatpush.xpose.msra.mxu0 0.0
    %359 = vmatpush.xpose.msra.mxu0 0.0
    %360 = vmatpush.xpose.msra.mxu0 0.0
    %361 = vmatpush.xpose.msra.mxu0 %v344
    %362 = vmatmul.f32.gmra.mxu0 %v342
    %v363 = vpop.f32.mrf.mxu0
    %v364 = vadd.f32 %v152, %v363
    %365 = vdwg.mxu0
    %v366 = vsel %vm156, %v336, -inf
    %367 = vmax.xlane.f32.xlu0 %v366
    %v368 = vpop.xlane.xlu0 %367
    %v369 = vsel %vm156, %v364, -inf
    %370 = vmax.xlane.f32.xlu0 %v369
    %v371 = vpop.xlane.xlu0 %370
    %v372 = vsub.f32 %v336, %v368
    %v373 = vsub.f32 %v364, %v371
    %v374 = vmul.f32 %v372, 1.442695
    %v375 = vpow.pop %v374
    %v376 = vmul.f32 %v373, 1.442695
    %v377 = vpow.pop %v376
    %v378 = vsel %vm156, %v375, 0.0
    %379 = vadd.xlane.f32.xlu0 %v378
    %v380 = vpop.xlane.xlu0 %379
    %v381 = vsel %vm156, %v377, 0.0
    %382 = vadd.xlane.f32.xlu0 %v381
    %v383 = vpop.xlane.xlu0 %382
    %384 = vrot.lane.b32.xlu0 %v144, 56
    %v385 = vpop.permute.xlu0 %384
    %v388 = vsel %vm156, %v375, 0
    %390 = vmatpush.msra.mxu0 0.0
    %391 = vmatpush.msra.mxu0 0.0
    %392 = vmatpush.msra.mxu0 0.0
    %393 = vmatpush.msra.mxu0 0.0
    %394 = vmatpush.msra.mxu0 0.0
    %395 = vmatpush.msra.mxu0 0.0
    %396 = vmatpush.msra.mxu0 0.0
    %397 = vmatpush.msra.mxu0 0.0
    %398 = vmatpush.msra.mxu0 0.0
    %399 = vmatpush.msra.mxu0 0.0
    %400 = vmatpush.msra.mxu0 0.0
    %401 = vmatpush.msra.mxu0 0.0
    %402 = vmatpush.msra.mxu0 0.0
    %403 = vmatpush.msra.mxu0 0.0
    %404 = vmatpush.msra.mxu0 0.0
    %405 = vmatpush.msra.mxu0 %v385
    %406 = vmatmul.f32.gmra.mxu0 %v388
    %v407 = vpop.f32.mrf.mxu0
    %v408 = vadd.f32 0.0, %v407
    %409 = vdwg.mxu0
    %410 = vrot.lane.b32.xlu0 %v147, 56
    %v411 = vpop.permute.xlu0 %410
    %v414 = vsel %vm156, %v377, 0
    %416 = vmatpush.msra.mxu0 0.0
    %417 = vmatpush.msra.mxu0 0.0
    %418 = vmatpush.msra.mxu0 0.0
    %419 = vmatpush.msra.mxu0 0.0
    %420 = vmatpush.msra.mxu0 0.0
    %421 = vmatpush.msra.mxu0 0.0
    %422 = vmatpush.msra.mxu0 0.0
    %423 = vmatpush.msra.mxu0 0.0
    %424 = vmatpush.msra.mxu0 0.0
    %425 = vmatpush.msra.mxu0 0.0
    %426 = vmatpush.msra.mxu0 0.0
    %427 = vmatpush.msra.mxu0 0.0
    %428 = vmatpush.msra.mxu0 0.0
    %429 = vmatpush.msra.mxu0 0.0
    %430 = vmatpush.msra.mxu0 0.0
    %431 = vmatpush.msra.mxu0 %v411
    %432 = vmatmul.f32.gmra.mxu0 %v414
    %v433 = vpop.f32.mrf.mxu0
    %v434 = vadd.f32 0.0, %v433
    %435 = vdwg.mxu0
    %v436 = vrcp.pop %v380
    %v437 = vmul.f32 %v380, %v436
    %v438 = vsub.f32 1.0, %v437
    %v439 = vmul.f32 %v436, %v438
    %v440 = vadd.f32 %v436, %v439
    %vm441 = vweird.f32 %v380
    %vm442 = vweird.f32 %v436
    %vm443 = vmor %vm441, %vm442
    %v444 = vsel %vm443, %v436, %v440
    %v445 = vand.u32 2147483647, %v380
    %vm446 = vcmp.eq.f32.partialorder %v445, 8.507059e+37
    %v447 = vand.u32 %v380, 2147483648
    %v448 = vor.u32 1.1754944e-38, %v447
    %v449 = vsel %vm446, %v448, %v444
    %v450 = vrcp.pop %v383
    %v451 = vmul.f32 %v383, %v450
    %v452 = vsub.f32 1.0, %v451
    %v453 = vmul.f32 %v450, %v452
    %v454 = vadd.f32 %v450, %v453
    %vm455 = vweird.f32 %v383
    %vm456 = vweird.f32 %v450
    %vm457 = vmor %vm455, %vm456
    %v458 = vsel %vm457, %v450, %v454
    %v459 = vand.u32 2147483647, %v383
    %vm460 = vcmp.eq.f32.partialorder %v459, 8.507059e+37
    %v461 = vand.u32 %v383, 2147483648
    %v462 = vor.u32 1.1754944e-38, %v461
    %v463 = vsel %vm460, %v462, %v458
    %v464 = vmul.f32 %v408, %v449
    %v465 = vmul.f32 %v434, %v463
    %466 = vrot.lane.b32.xlu0 %v149, 112
    %v467 = vpop.permute.xlu0 %466
    %468 = vrot.lane.b32.xlu0 %v144, 80
    %v469 = vpop.permute.xlu0 %468
    %v470 = vsel %vm156, %v467, 0
    %v472 = vsel %vm156, %v469, 0
    %474 = vmatpush.xpose.msra.mxu0 0.0
    %475 = vmatpush.xpose.msra.mxu0 0.0
    %476 = vmatpush.xpose.msra.mxu0 0.0
    %477 = vmatpush.xpose.msra.mxu0 0.0
    %478 = vmatpush.xpose.msra.mxu0 0.0
    %479 = vmatpush.xpose.msra.mxu0 0.0
    %480 = vmatpush.xpose.msra.mxu0 0.0
    %481 = vmatpush.xpose.msra.mxu0 0.0
    %482 = vmatpush.xpose.msra.mxu0 0.0
    %483 = vmatpush.xpose.msra.mxu0 0.0
    %484 = vmatpush.xpose.msra.mxu0 0.0
    %485 = vmatpush.xpose.msra.mxu0 0.0
    %486 = vmatpush.xpose.msra.mxu0 0.0
    %487 = vmatpush.xpose.msra.mxu0 0.0
    %488 = vmatpush.xpose.msra.mxu0 0.0
    %489 = vmatpush.xpose.msra.mxu0 %v472
    %490 = vmatmul.f32.gmra.mxu0 %v470
    %v491 = vpop.f32.mrf.mxu0
    %v492 = vadd.f32 %v151, %v491
    %493 = vdwg.mxu0
    %494 = vrot.lane.b32.xlu0 %v150, 112
    %v495 = vpop.permute.xlu0 %494
    %496 = vrot.lane.b32.xlu0 %v147, 80
    %v497 = vpop.permute.xlu0 %496
    %v498 = vsel %vm156, %v495, 0
    %v500 = vsel %vm156, %v497, 0
    %502 = vmatpush.xpose.msra.mxu0 0.0
    %503 = vmatpush.xpose.msra.mxu0 0.0
    %504 = vmatpush.xpose.msra.mxu0 0.0
    %505 = vmatpush.xpose.msra.mxu0 0.0
    %506 = vmatpush.xpose.msra.mxu0 0.0
    %507 = vmatpush.xpose.msra.mxu0 0.0
    %508 = vmatpush.xpose.msra.mxu0 0.0
    %509 = vmatpush.xpose.msra.mxu0 0.0
    %510 = vmatpush.xpose.msra.mxu0 0.0
    %511 = vmatpush.xpose.msra.mxu0 0.0
    %512 = vmatpush.xpose.msra.mxu0 0.0
    %513 = vmatpush.xpose.msra.mxu0 0.0
    %514 = vmatpush.xpose.msra.mxu0 0.0
    %515 = vmatpush.xpose.msra.mxu0 0.0
    %516 = vmatpush.xpose.msra.mxu0 0.0
    %517 = vmatpush.xpose.msra.mxu0 %v500
    %518 = vmatmul.f32.gmra.mxu0 %v498
    %v519 = vpop.f32.mrf.mxu0
    %v520 = vadd.f32 %v152, %v519
    %521 = vdwg.mxu0
    %v522 = vsel %vm156, %v492, -inf
    %523 = vmax.xlane.f32.xlu0 %v522
    %v524 = vpop.xlane.xlu0 %523
    %v525 = vsel %vm156, %v520, -inf
    %526 = vmax.xlane.f32.xlu0 %v525
    %v527 = vpop.xlane.xlu0 %526
    %v528 = vsub.f32 %v492, %v524
    %v529 = vsub.f32 %v520, %v527
    %v530 = vmul.f32 %v528, 1.442695
    %v531 = vpow.pop %v530
    %v532 = vmul.f32 %v529, 1.442695
    %v533 = vpow.pop %v532
    %v534 = vsel %vm156, %v531, 0.0
    %535 = vadd.xlane.f32.xlu0 %v534
    %v536 = vpop.xlane.xlu0 %535
    %v537 = vsel %vm156, %v533, 0.0
    %538 = vadd.xlane.f32.xlu0 %v537
    %v539 = vpop.xlane.xlu0 %538
    %540 = vrot.lane.b32.xlu0 %v144, 48
    %v541 = vpop.permute.xlu0 %540
    %v544 = vsel %vm156, %v531, 0
    %546 = vmatpush.msra.mxu0 0.0
    %547 = vmatpush.msra.mxu0 0.0
    %548 = vmatpush.msra.mxu0 0.0
    %549 = vmatpush.msra.mxu0 0.0
    %550 = vmatpush.msra.mxu0 0.0
    %551 = vmatpush.msra.mxu0 0.0
    %552 = vmatpush.msra.mxu0 0.0
    %553 = vmatpush.msra.mxu0 0.0
    %554 = vmatpush.msra.mxu0 0.0
    %555 = vmatpush.msra.mxu0 0.0
    %556 = vmatpush.msra.mxu0 0.0
    %557 = vmatpush.msra.mxu0 0.0
    %558 = vmatpush.msra.mxu0 0.0
    %559 = vmatpush.msra.mxu0 0.0
    %560 = vmatpush.msra.mxu0 0.0
    %561 = vmatpush.msra.mxu0 %v541
    %562 = vmatmul.f32.gmra.mxu0 %v544
    %v563 = vpop.f32.mrf.mxu0
    %v564 = vadd.f32 0.0, %v563
    %565 = vdwg.mxu0
    %566 = vrot.lane.b32.xlu0 %v147, 48
    %v567 = vpop.permute.xlu0 %566
    %v570 = vsel %vm156, %v533, 0
    %572 = vmatpush.msra.mxu0 0.0
    %573 = vmatpush.msra.mxu0 0.0
    %574 = vmatpush.msra.mxu0 0.0
    %575 = vmatpush.msra.mxu0 0.0
    %576 = vmatpush.msra.mxu0 0.0
    %577 = vmatpush.msra.mxu0 0.0
    %578 = vmatpush.msra.mxu0 0.0
    %579 = vmatpush.msra.mxu0 0.0
    %580 = vmatpush.msra.mxu0 0.0
    %581 = vmatpush.msra.mxu0 0.0
    %582 = vmatpush.msra.mxu0 0.0
    %583 = vmatpush.msra.mxu0 0.0
    %584 = vmatpush.msra.mxu0 0.0
    %585 = vmatpush.msra.mxu0 0.0
    %586 = vmatpush.msra.mxu0 0.0
    %587 = vmatpush.msra.mxu0 %v567
    %588 = vmatmul.f32.gmra.mxu0 %v570
    %v589 = vpop.f32.mrf.mxu0
    %v590 = vadd.f32 0.0, %v589
    %591 = vdwg.mxu0
    %v592 = vrcp.pop %v536
    %v593 = vmul.f32 %v536, %v592
    %v594 = vsub.f32 1.0, %v593
    %v595 = vmul.f32 %v592, %v594
    %v596 = vadd.f32 %v592, %v595
    %vm597 = vweird.f32 %v536
    %vm598 = vweird.f32 %v592
    %vm599 = vmor %vm597, %vm598
    %v600 = vsel %vm599, %v592, %v596
    %v601 = vand.u32 2147483647, %v536
    %vm602 = vcmp.eq.f32.partialorder %v601, 8.507059e+37
    %v603 = vand.u32 %v536, 2147483648
    %v604 = vor.u32 1.1754944e-38, %v603
    %v605 = vsel %vm602, %v604, %v600
    %v606 = vrcp.pop %v539
    %v607 = vmul.f32 %v539, %v606
    %v608 = vsub.f32 1.0, %v607
    %v609 = vmul.f32 %v606, %v608
    %v610 = vadd.f32 %v606, %v609
    %vm611 = vweird.f32 %v539
    %vm612 = vweird.f32 %v606
    %vm613 = vmor %vm611, %vm612
    %v614 = vsel %vm613, %v606, %v610
    %v615 = vand.u32 2147483647, %v539
    %vm616 = vcmp.eq.f32.partialorder %v615, 8.507059e+37
    %v617 = vand.u32 %v539, 2147483648
    %v618 = vor.u32 1.1754944e-38, %v617
    %v619 = vsel %vm616, %v618, %v614
    %v620 = vmul.f32 %v564, %v605
    %v621 = vmul.f32 %v590, %v619
    %622 = vrot.lane.b32.xlu0 %v149, 104
    %v623 = vpop.permute.xlu0 %622
    %624 = vrot.lane.b32.xlu0 %v144, 72
    %v625 = vpop.permute.xlu0 %624
    %v626 = vsel %vm156, %v623, 0
    %v628 = vsel %vm156, %v625, 0
    %630 = vmatpush.xpose.msra.mxu0 0.0
    %631 = vmatpush.xpose.msra.mxu0 0.0
    %632 = vmatpush.xpose.msra.mxu0 0.0
    %633 = vmatpush.xpose.msra.mxu0 0.0
    %634 = vmatpush.xpose.msra.mxu0 0.0
    %635 = vmatpush.xpose.msra.mxu0 0.0
    %636 = vmatpush.xpose.msra.mxu0 0.0
    %637 = vmatpush.xpose.msra.mxu0 0.0
    %638 = vmatpush.xpose.msra.mxu0 0.0
    %639 = vmatpush.xpose.msra.mxu0 0.0
    %640 = vmatpush.xpose.msra.mxu0 0.0
    %641 = vmatpush.xpose.msra.mxu0 0.0
    %642 = vmatpush.xpose.msra.mxu0 0.0
    %643 = vmatpush.xpose.msra.mxu0 0.0
    %644 = vmatpush.xpose.msra.mxu0 0.0
    %645 = vmatpush.xpose.msra.mxu0 %v628
    %646 = vmatmul.f32.gmra.mxu0 %v626
    %v647 = vpop.f32.mrf.mxu0
    %v648 = vadd.f32 %v151, %v647
    %649 = vdwg.mxu0
    %650 = vrot.lane.b32.xlu0 %v150, 104
    %v651 = vpop.permute.xlu0 %650
    %652 = vrot.lane.b32.xlu0 %v147, 72
    %v653 = vpop.permute.xlu0 %652
    %v654 = vsel %vm156, %v651, 0
    %v656 = vsel %vm156, %v653, 0
    %658 = vmatpush.xpose.msra.mxu0 0.0
    %659 = vmatpush.xpose.msra.mxu0 0.0
    %660 = vmatpush.xpose.msra.mxu0 0.0
    %661 = vmatpush.xpose.msra.mxu0 0.0
    %662 = vmatpush.xpose.msra.mxu0 0.0
    %663 = vmatpush.xpose.msra.mxu0 0.0
    %664 = vmatpush.xpose.msra.mxu0 0.0
    %665 = vmatpush.xpose.msra.mxu0 0.0
    %666 = vmatpush.xpose.msra.mxu0 0.0
    %667 = vmatpush.xpose.msra.mxu0 0.0
    %668 = vmatpush.xpose.msra.mxu0 0.0
    %669 = vmatpush.xpose.msra.mxu0 0.0
    %670 = vmatpush.xpose.msra.mxu0 0.0
    %671 = vmatpush.xpose.msra.mxu0 0.0
    %672 = vmatpush.xpose.msra.mxu0 0.0
    %673 = vmatpush.xpose.msra.mxu0 %v656
    %674 = vmatmul.f32.gmra.mxu0 %v654
    %v675 = vpop.f32.mrf.mxu0
    %v676 = vadd.f32 %v152, %v675
    %677 = vdwg.mxu0
    %v678 = vsel %vm156, %v648, -inf
    %679 = vmax.xlane.f32.xlu0 %v678
    %v680 = vpop.xlane.xlu0 %679
    %v681 = vsel %vm156, %v676, -inf
    %682 = vmax.xlane.f32.xlu0 %v681
    %v683 = vpop.xlane.xlu0 %682
    %v684 = vsub.f32 %v648, %v680
    %v685 = vsub.f32 %v676, %v683
    %v686 = vmul.f32 %v684, 1.442695
    %v687 = vpow.pop %v686
    %v688 = vmul.f32 %v685, 1.442695
    %v689 = vpow.pop %v688
    %v690 = vsel %vm156, %v687, 0.0
    %691 = vadd.xlane.f32.xlu0 %v690
    %v692 = vpop.xlane.xlu0 %691
    %v693 = vsel %vm156, %v689, 0.0
    %694 = vadd.xlane.f32.xlu0 %v693
    %v695 = vpop.xlane.xlu0 %694
    %696 = vrot.lane.b32.xlu0 %v144, 40
    %v697 = vpop.permute.xlu0 %696
    %v700 = vsel %vm156, %v687, 0
    %702 = vmatpush.msra.mxu0 0.0
    %703 = vmatpush.msra.mxu0 0.0
    %704 = vmatpush.msra.mxu0 0.0
    %705 = vmatpush.msra.mxu0 0.0
    %706 = vmatpush.msra.mxu0 0.0
    %707 = vmatpush.msra.mxu0 0.0
    %708 = vmatpush.msra.mxu0 0.0
    %709 = vmatpush.msra.mxu0 0.0
    %710 = vmatpush.msra.mxu0 0.0
    %711 = vmatpush.msra.mxu0 0.0
    %712 = vmatpush.msra.mxu0 0.0
    %713 = vmatpush.msra.mxu0 0.0
    %714 = vmatpush.msra.mxu0 0.0
    %715 = vmatpush.msra.mxu0 0.0
    %716 = vmatpush.msra.mxu0 0.0
    %717 = vmatpush.msra.mxu0 %v697
    %718 = vmatmul.f32.gmra.mxu0 %v700
    %v719 = vpop.f32.mrf.mxu0
    %v720 = vadd.f32 0.0, %v719
    %721 = vdwg.mxu0
    %722 = vrot.lane.b32.xlu0 %v147, 40
    %v723 = vpop.permute.xlu0 %722
    %v726 = vsel %vm156, %v689, 0
    %728 = vmatpush.msra.mxu0 0.0
    %729 = vmatpush.msra.mxu0 0.0
    %730 = vmatpush.msra.mxu0 0.0
    %731 = vmatpush.msra.mxu0 0.0
    %732 = vmatpush.msra.mxu0 0.0
    %733 = vmatpush.msra.mxu0 0.0
    %734 = vmatpush.msra.mxu0 0.0
    %735 = vmatpush.msra.mxu0 0.0
    %736 = vmatpush.msra.mxu0 0.0
    %737 = vmatpush.msra.mxu0 0.0
    %738 = vmatpush.msra.mxu0 0.0
    %739 = vmatpush.msra.mxu0 0.0
    %740 = vmatpush.msra.mxu0 0.0
    %741 = vmatpush.msra.mxu0 0.0
    %742 = vmatpush.msra.mxu0 0.0
    %743 = vmatpush.msra.mxu0 %v723
    %744 = vmatmul.f32.gmra.mxu0 %v726
    %v745 = vpop.f32.mrf.mxu0
    %v746 = vadd.f32 0.0, %v745
    %747 = vdwg.mxu0
    %v748 = vrcp.pop %v692
    %v749 = vmul.f32 %v692, %v748
    %v750 = vsub.f32 1.0, %v749
    %v751 = vmul.f32 %v748, %v750
    %v752 = vadd.f32 %v748, %v751
    %vm753 = vweird.f32 %v692
    %vm754 = vweird.f32 %v748
    %vm755 = vmor %vm753, %vm754
    %v756 = vsel %vm755, %v748, %v752
    %v757 = vand.u32 2147483647, %v692
    %vm758 = vcmp.eq.f32.partialorder %v757, 8.507059e+37
    %v759 = vand.u32 %v692, 2147483648
    %v760 = vor.u32 1.1754944e-38, %v759
    %v761 = vsel %vm758, %v760, %v756
    %v762 = vrcp.pop %v695
    %v763 = vmul.f32 %v695, %v762
    %v764 = vsub.f32 1.0, %v763
    %v765 = vmul.f32 %v762, %v764
    %v766 = vadd.f32 %v762, %v765
    %vm767 = vweird.f32 %v695
    %vm768 = vweird.f32 %v762
    %vm769 = vmor %vm767, %vm768
    %v770 = vsel %vm769, %v762, %v766
    %v771 = vand.u32 2147483647, %v695
    %vm772 = vcmp.eq.f32.partialorder %v771, 8.507059e+37
    %v773 = vand.u32 %v695, 2147483648
    %v774 = vor.u32 1.1754944e-38, %v773
    %v775 = vsel %vm772, %v774, %v770
    %v776 = vmul.f32 %v720, %v761
    %v777 = vmul.f32 %v746, %v775
    %780 = vrot.lane.b32.xlu0 %v464, 8
    %v781 = vpop.permute.xlu0 %780
    %782 = vrot.lane.b32.xlu0 %v465, 8
    %v783 = vpop.permute.xlu0 %782
    %788 = vrot.lane.b32.xlu0 %v620, 16
    %v789 = vpop.permute.xlu0 %788
    %790 = vrot.lane.b32.xlu0 %v621, 16
    %v791 = vpop.permute.xlu0 %790
    %796 = vrot.lane.b32.xlu0 %v776, 24
    %v797 = vpop.permute.xlu0 %796
    %798 = vrot.lane.b32.xlu0 %v777, 24
    %v799 = vpop.permute.xlu0 %798
    %v802 = vsel %vm156, %v308, %v781
    %v803 = vsel %vm156, %v309, %v783
    %vm804 = vcmask 130048
    %v805 = vsel %vm804, %v802, %v789
    %v806 = vsel %vm804, %v803, %v791
    %vm807 = vcmask 195584
    %v808 = vsel %vm807, %v805, %v797
    %v809 = vsel %vm807, %v806, %v799
    %v810 = vld [vmem:[%s5] sm:$0xff]
    %v811 = vld [vmem:[%s5 + $0x8] sm:$0xff]
    %v812 = vld [vmem:[%s5 + $0x10] sm:$0xff]
    %v813 = vld [vmem:[%s5 + $0x18] sm:$0xff]
    %v815 = vsel %vm54, %v808, 0
    %v818 = vsel %vm54, %v809, 0
    %820 = vmatpush.msra.mxu0 0.0
    %821 = vmatpush.msra.mxu0 0.0
    %822 = vmatpush.msra.mxu0 0.0
    %823 = vmatpush.msra.mxu0 0.0
    %824 = vmatpush.msra.mxu0 0.0
    %825 = vmatpush.msra.mxu0 0.0
    %826 = vmatpush.msra.mxu0 0.0
    %827 = vmatpush.msra.mxu0 0.0
    %828 = vmatpush.msra.mxu0 0.0
    %829 = vmatpush.msra.mxu0 0.0
    %830 = vmatpush.msra.mxu0 0.0
    %831 = vmatpush.msra.mxu0 0.0
    %832 = vmatpush.msra.mxu0 %v813
    %833 = vmatpush.msra.mxu0 %v812
    %834 = vmatpush.msra.mxu0 %v811
    %835 = vmatpush.msra.mxu0 %v810
    %836 = vmatmul.f32.gmra.mxu0 %v815
    %v837 = vpop.f32.mrf.mxu0
    %v838 = vadd.f32 0.0, %v837
    %839 = vmatmul.f32.gmra.mxu0 %v818
    %v840 = vpop.f32.mrf.mxu0
    %v841 = vadd.f32 0.0, %v840
    %842 = vdwg.mxu0
    %v843 = vadd.f32 %v42, %v838
    %v844 = vadd.f32 %v43, %v841
    %v845 = vld [vmem:[%s6] sm:$0x1]
    %v846 = vld [vmem:[%s7] sm:$0x1]
    %v847 = vsel %vm54, %v843, 0.0
    %848 = vadd.xlane.f32.xlu0 %v847
    %v849 = vpop.xlane.xlu0 %848
    %v850 = vsel %vm54, %v844, 0.0
    %851 = vadd.xlane.f32.xlu0 %v850
    %v852 = vpop.xlane.xlu0 %851
    %v853 = vmul.f32 %v849, %v67
    %v854 = vmul.f32 %v852, %v67
    %v855 = vsub.f32 %v843, %v853
    %v856 = vsub.f32 %v844, %v854
    %v857 = vmul.f32 %v855, %v855
    %v858 = vmul.f32 %v856, %v856
    %v859 = vsel %vm54, %v857, 0.0
    %860 = vadd.xlane.f32.xlu0 %v859
    %v861 = vpop.xlane.xlu0 %860
    %v862 = vsel %vm54, %v858, 0.0
    %863 = vadd.xlane.f32.xlu0 %v862
    %v864 = vpop.xlane.xlu0 %863
    %v865 = vmul.f32 %v861, %v67
    %v866 = vmul.f32 %v864, %v67
    %v867 = vadd.f32 %v865, 1e-05
    %v868 = vadd.f32 %v866, 1e-05
    %v869 = vrsqrt.pop %v867
    %v870 = vmul.f32 %v869, %v867
    %v871 = vmul.f32 %v870, %v869
    %v872 = vmul.f32 0.5, %v871
    %v873 = vsub.f32 1.5, %v872
    %v874 = vmul.f32 %v869, %v873
    %vm875 = vweird.f32 %v867
    %vm876 = vweird.f32 %v869
    %vm877 = vmor %vm875, %vm876
    %v878 = vsel %vm877, %v869, %v874
    %v879 = vrsqrt.pop %v868
    %v880 = vmul.f32 %v879, %v868
    %v881 = vmul.f32 %v880, %v879
    %v882 = vmul.f32 0.5, %v881
    %v883 = vsub.f32 1.5, %v882
    %v884 = vmul.f32 %v879, %v883
    %vm885 = vweird.f32 %v868
    %vm886 = vweird.f32 %v879
    %vm887 = vmor %vm885, %vm886
    %v888 = vsel %vm887, %v879, %v884
    %v889 = vmul.f32 %v855, %v878
    %v890 = vmul.f32 %v856, %v888
    %v892 = vperm.slane %v845, 0
    %v894 = vmul.f32 %v889, %v892
    %v895 = vmul.f32 %v890, %v892
    %v897 = vperm.slane %v846, 0
    %v899 = vadd.f32 %v894, %v897
    %v900 = vadd.f32 %v895, %v897
    %v901 = vld [vmem:[%s8] sm:$0xff]
    %v902 = vld [vmem:[%s8 + $0x8] sm:$0xff]
    %v903 = vld [vmem:[%s8 + $0x10] sm:$0xff]
    %v904 = vld [vmem:[%s8 + $0x18] sm:$0xff]
    %v905 = vld [vmem:[%s9] sm:$0x1]
    %v907 = vperm.slane %v905, 0
    %v910 = vsel %vm54, %v899, 0
    %v913 = vsel %vm54, %v900, 0
    %915 = vmatpush.msra.mxu0 0.0
    %916 = vmatpush.msra.mxu0 0.0
    %917 = vmatpush.msra.mxu0 0.0
    %918 = vmatpush.msra.mxu0 0.0
    %919 = vmatpush.msra.mxu0 0.0
    %920 = vmatpush.msra.mxu0 0.0
    %921 = vmatpush.msra.mxu0 0.0
    %922 = vmatpush.msra.mxu0 0.0
    %923 = vmatpush.msra.mxu0 0.0
    %924 = vmatpush.msra.mxu0 0.0
    %925 = vmatpush.msra.mxu0 0.0
    %926 = vmatpush.msra.mxu0 0.0
    %927 = vmatpush.msra.mxu0 %v904
    %928 = vmatpush.msra.mxu0 %v903
    %929 = vmatpush.msra.mxu0 %v902
    %930 = vmatpush.msra.mxu0 %v901
    %931 = vmatmul.f32.gmra.mxu0 %v910
    %v932 = vpop.f32.mrf.mxu0
    %v933 = vadd.f32 %v907, %v932
    %934 = vmatmul.f32.gmra.mxu0 %v913
    %v935 = vpop.f32.mrf.mxu0
    %v936 = vadd.f32 %v907, %v935
    %937 = vdwg.mxu0
    %vm938 = vcmp.gt.f32.partialorder %v933, 0.0
    %vm939 = vcmp.gt.f32.partialorder %v936, 0.0
    %v940 = vmin.f32 %v933, 0.0
    %v941 = vmin.f32 %v936, 0.0
    %v942 = vmul.f32 %v940, 1.442695
    %v943 = vpow.pop %v942
    %v944 = vmul.f32 %v941, 1.442695
    %v945 = vpow.pop %v944
    %v946 = vsub.f32 %v943, 1.0
    %v947 = vsub.f32 %v945, 1.0
    %v948 = vsel %vm938, %v933, %v946
    %v949 = vsel %vm939, %v936, %v947
    %v950 = vld [vmem:[%s10] sm:$0xff]
    %v951 = vld [vmem:[%s10 + $0x8] sm:$0xff]
    %v952 = vld [vmem:[%s10 + $0x10] sm:$0xff]
    %v953 = vld [vmem:[%s10 + $0x18] sm:$0xff]
    %v954 = vld [vmem:[%s10 + $0x20] sm:$0xff]
    %v955 = vld [vmem:[%s10 + $0x28] sm:$0xff]
    %v956 = vld [vmem:[%s10 + $0x30] sm:$0xff]
    %v957 = vld [vmem:[%s10 + $0x38] sm:$0xff]
    %v958 = vld [vmem:[%s10 + $0x40] sm:$0xff]
    %v959 = vld [vmem:[%s10 + $0x48] sm:$0xff]
    %v960 = vld [vmem:[%s10 + $0x50] sm:$0xff]
    %v961 = vld [vmem:[%s10 + $0x58] sm:$0xff]
    %v962 = vld [vmem:[%s10 + $0x60] sm:$0xff]
    %v963 = vld [vmem:[%s10 + $0x68] sm:$0xff]
    %v964 = vld [vmem:[%s10 + $0x70] sm:$0xff]
    %v965 = vld [vmem:[%s10 + $0x78] sm:$0xff]
    %v966 = vld [vmem:[%s11] sm:$0x1]
    %v968 = vperm.slane %v966, 0
    %970 = vmatpush.msra.mxu0 %v965
    %971 = vmatpush.msra.mxu0 %v964
    %972 = vmatpush.msra.mxu0 %v963
    %973 = vmatpush.msra.mxu0 %v962
    %974 = vmatpush.msra.mxu0 %v961
    %975 = vmatpush.msra.mxu0 %v960
    %976 = vmatpush.msra.mxu0 %v959
    %977 = vmatpush.msra.mxu0 %v958
    %978 = vmatpush.msra.mxu0 %v957
    %979 = vmatpush.msra.mxu0 %v956
    %980 = vmatpush.msra.mxu0 %v955
    %981 = vmatpush.msra.mxu0 %v954
    %982 = vmatpush.msra.mxu0 %v953
    %983 = vmatpush.msra.mxu0 %v952
    %984 = vmatpush.msra.mxu0 %v951
    %985 = vmatpush.msra.mxu0 %v950
    %986 = vmatmul.f32.gmra.mxu0 %v948
    %v987 = vpop.f32.mrf.mxu0
    %v988 = vadd.f32 %v968, %v987
    %989 = vmatmul.f32.gmra.mxu0 %v949
    %v990 = vpop.f32.mrf.mxu0
    %v991 = vadd.f32 %v968, %v990
    %992 = vdwg.mxu0
    %v993 = vadd.f32 %v843, %v988
    %v994 = vadd.f32 %v844, %v991
    %995 = vst.msk [vmem:[#allocation2] sm:$0xff] %vm54, %v993
    %996 = vst.msk [vmem:[#allocation2 + $0x8] sm:$0xff] %vm54, %v994
    // Predicated region
    $region50: #{tpu_custom_call.1} parent=1 // pred_check
      _
    $region51: #{tpu_custom_call.1} parent=1 // pred_check_branch
      %998 = sbr.rel (0) target = $region53
    $region52: #{tpu_custom_call.1} parent=1 // pred_region
      %1000 = vsyncadd [#allocation3], 0
      %s1001 = sshll.u32 [#allocation2], 4
      %s1002 = int_to_ptr.vmem [resolvable:$true] %s1001
      %s1003 = sshll.u32 %s12, 4
      %s1004 = int_to_ptr.hbm [resolvable:$true] %s1003
      %1009 = dma.vmem_to_hbm [thread:$0]  %s1002, 256, %s1004, [#allocation3], 128, 128, 8
    $region53: #{tpu_custom_call.1} parent=1 // pred_fallthru
      _
    // Predicated region
    $region54: #{tpu_custom_call.1} parent=1 // pred_check
      _
    $region55: #{tpu_custom_call.1} parent=1 // pred_check_branch
      %1011 = sbr.rel (0) target = $region57
    $region56: #{tpu_custom_call.1} parent=1 // pred_region
      %1013 = dma.done [#allocation3], 256
    $region57: #{tpu_custom_call.1} parent=1 // pred_fallthru
      _
    %1014 = vsyncpa [#allocation3], 1

</llo_original>
